<compile_context>
chip_gen: v6e
topology: v6e:2x2x1
jax: 0.10.0
libtpu: 0.0.40
codegen_flags: <defaults>
</compile_context>

<pallas_src>
import functools
import math

import jax
import jax.numpy as jnp
from jax.experimental import pallas as pl
from jax.experimental.pallas import tpu as pltpu


# ---------------------------------------------------------------------------
# Pallas kernel: one padded image per grid step.
#   x_ref: (1, Cp, Lx)    channel-padded, spatially padded, flattened image
#                         (Lx = (Hp+1)*Wp; the extra slack row keeps shifted
#                          reads in bounds).
#   w_ref: (k*k, O, Cp)   weight reordered so
#                         w_ref[ki*k+kj, o, c] == W[o, c*k*k + ki*k + kj]
#   b_ref: (O, 1)         bias
#   o_ref: (1, O, Lout)   Lout = Ho*Wp (columns >= Wo are junk, sliced off in
#                          the wrapper).  Lane axis = Lout -> dense stores.
# ---------------------------------------------------------------------------
def _fused_kernel(x_ref, w_ref, b_ref, o_ref, *, k, Wp):
    kk_total, n_out, _ = w_ref.shape
    l_out = o_ref.shape[2]

    acc = jnp.zeros((n_out, l_out), jnp.float32)
    for kk in range(kk_total):                      # static unroll over k*k taps
        off = (kk // k) * Wp + (kk % k)             # shift in flattened padded coords
        acc = acc + jnp.dot(
            w_ref[kk],                              # (O, Cp)
            x_ref[0, :, off:off + l_out],           # (Cp, Lout) lane-dense slice
            preferred_element_type=jnp.float32,
        )
    o_ref[0] = (acc + b_ref[...]).astype(o_ref.dtype)   # (O,1) broadcasts over lanes


# ---------------------------------------------------------------------------
# Wrapper: padding / weight reorder / pallas_call / output un-scramble.
# ---------------------------------------------------------------------------
def ohm_linear_fused(x, weight, bias, *, kernel_size, do_padding,
                     compute_dtype=jnp.float32):
    """Forward of the OHM Linear module with the im2col fused into the kernel.

    x:      (B, C, H, W) float32
    weight: (O, C*k*k)   float32, torch.nn.Unfold channel order (c, ki, kj)
    bias:   (O, 1)       float32
    Returns the torch-equivalent `result.view(-1, O, L_sqrt, L_sqrt)`.
    """
    k = kernel_size
    B, C, H, W = x.shape
    O = weight.shape[0]

    if do_padding:
        pad_total = k - 1
        pb, pe = pad_total // 2, pad_total - pad_total // 2
    else:
        pb = pe = 0
    Hp, Wp = H + pb + pe, W + pb + pe
    Ho, Wo = Hp - k + 1, Wp - k + 1
    L = Ho * Wo
    L_sqrt = int(math.sqrt(L))

    # Sublane-align the channel (contraction) dim.
    Cp = max(8, ((C + 7) // 8) * 8)

    # Single pad pass over the INPUT (no 9x im2col matrix is ever written):
    #   spatial 'same' padding + one extra bottom slack row + zero channels.
    xp = jnp.pad(x, ((0, 0), (0, Cp - C), (pb, pe + 1), (pb, pe)))
    Lx = (Hp + 1) * Wp
    x_flat = xp.reshape(B, Cp, Lx)

    # Reorder/pad weight: w_kk[ki*k+kj, o, c] = W[o, c*k*k + ki*k + kj].
    w_kk = jnp.transpose(weight.reshape(O, C, k, k), (2, 3, 0, 1)).reshape(k * k, O, C)
    w_kk = jnp.pad(w_kk, ((0, 0), (0, 0), (0, Cp - C)))

    if compute_dtype != jnp.float32:
        x_flat = x_flat.astype(compute_dtype)
        w_kk = w_kk.astype(compute_dtype)
    b2 = bias.reshape(O, 1).astype(jnp.float32)

    Lout = Ho * Wp                       # compute over padded columns; crop later

    # VMEM budget: double-buffered streamed input & output blocks + resident
    # weights/bias, plus generous headroom for compiler scratch.
    item = jnp.dtype(x_flat.dtype).itemsize
    need = (2 * Cp * Lx * item            # input block (double-buffered)
            + 2 * O * Lout * 4            # output block (double-buffered)
            + 2 * w_kk.size * item        # weights
            + 2 * O * 4)                  # bias
    vmem_limit = int(min(48 * 1024 * 1024, max(8 * 1024 * 1024, 4 * need)))

    kernel = functools.partial(_fused_kernel, k=k, Wp=Wp)

    y_pad = pl.pallas_call(
        kernel,
        out_shape=jax.ShapeDtypeStruct((B, O, Lout), jnp.float32),
        grid_spec=pltpu.PrefetchScalarGridSpec(
            num_scalar_prefetch=0,
            grid=(B,),                                          # one image / step
            in_specs=[
                pl.BlockSpec((1, Cp, Lx), lambda b: (b, 0, 0)),     # streamed image
                pl.BlockSpec((k * k, O, Cp), lambda b: (0, 0, 0)),  # resident weights
                pl.BlockSpec((O, 1), lambda b: (0, 0)),             # resident bias
            ],
            out_specs=pl.BlockSpec((1, O, Lout), lambda b: (b, 0, 0)),  # lane-dense
        ),
        compiler_params=pltpu.CompilerParams(
            dimension_semantics=("parallel",),     # images independent (v7x megacore)
            vmem_limit_bytes=vmem_limit,
        ),
    )(x_flat, w_kk, b2)

    # Drop the padded columns, reorder to the (B*L, O) row-major buffer the
    # torch reference builds, then reproduce its raw view(-1, O, Ls, Ls).
    y = y_pad.reshape(B, O, Ho, Wp)[:, :, :, :Wo]            # (B, O, Ho, Wo)
    y = jnp.transpose(y, (0, 2, 3, 1)).reshape(B * L, O)     # rows: b-major, loc-minor
    return y.reshape(-1, O, L_sqrt, L_sqrt)


# ---------------------------------------------------------------------------
# Module wrapper (parameter init identical to the torch module).
# ---------------------------------------------------------------------------
class LinearPallas:
    """Pallas port of the OHM `Linear` module (forward only)."""

    def __init__(self, in_channels, out_channels, kernel_size=3,
                 do_padding=False, key=None, compute_dtype=jnp.float32):
        self.in_channels = in_channels
        self.out_channels = out_channels
        self.kernel_size = kernel_size
        self.padding = do_padding
        self.compute_dtype = compute_dtype
        ck = in_channels * kernel_size * kernel_size
        bound = math.sqrt(6.0 / (ck + out_channels))          # xavier_uniform_
        self.weight = jax.random.uniform(
            key, (out_channels, ck), jnp.float32, -bound, bound)
        self.bias = jnp.zeros((out_channels, 1), jnp.float32)

    def __call__(self, x):
        return ohm_linear_fused(
            x, self.weight, self.bias,
            kernel_size=self.kernel_size, do_padding=self.padding,
            compute_dtype=self.compute_dtype)


# ---------------------------------------------------------------------------
# Pure-JAX reference (mirrors the torch unfold / OHMLinearFunction / view path)
# ---------------------------------------------------------------------------
def fixed_padding(x, kernel_size, dilation=1):
    keff = kernel_size + (kernel_size - 1) * (dilation - 1)
    pad_total = keff - 1
    pad_beg = pad_total // 2
    pad_end = pad_total - pad_beg
    return jnp.pad(x, ((0, 0), (0, 0), (pad_beg, pad_end), (pad_beg, pad_end)))


def reference_forward(x, weight, bias, kernel_size, do_padding):
    k = kernel_size
    if do_padding:
        x = fixed_padding(x, k)
    B, C, H, W = x.shape
    Ho, Wo = H - k + 1, W - k + 1
    cols = []
    for ki in range(k):
        for kj in range(k):
            cols.append(x[:, :, ki:ki + Ho, kj:kj + Wo])
    p = jnp.stack(cols, axis=2).reshape(B, C * k * k, Ho * Wo)   # torch unfold order
    m = jnp.transpose(p, (0, 2, 1)).reshape(B * Ho * Wo, C * k * k)
    y = jnp.dot(m, weight.T, precision=jax.lax.Precision.HIGHEST) + bias.T
    L_sqrt = int(math.sqrt(Ho * Wo))
    return y.reshape(-1, weight.shape[0], L_sqrt, L_sqrt)


if __name__ == "__main__":
    key = jax.random.PRNGKey(0)
    kx, kw = jax.random.split(key)

    B, C, H, W = 2, 4, 16, 16
    out_channels = 8
    x = jax.random.normal(kx, (B, C, H, W), jnp.float32)

    mod = LinearPallas(C, out_channels, kernel_size=3, do_padding=True, key=kw)
    fwd = jax.jit(lambda inp: mod(inp))
    out = jax.block_until_ready(fwd(x))
    assert out.shape == (B, out_channels, H, W), out.shape

    ref = reference_forward(x, mod.weight, mod.bias, 3, True)
    max_err = float(jnp.max(jnp.abs(out - ref)))
    assert jnp.allclose(out, ref, rtol=2e-2, atol=2e-2), f"max_err={max_err}"

    print("KERNEL_OK")
</pallas_src>

<mosaic_0001>
module attributes {stable_mosaic.version = 11 : i64} {
  func.func @_fused_kernel(%arg0: i32, %arg1: memref<1x8x342xf32, #tpu.memory_space<vmem>>, %arg2: memref<9x8x8xf32, #tpu.memory_space<vmem>>, %arg3: memref<8x1xf32, #tpu.memory_space<vmem>>, %arg4: memref<1x8x288xf32, #tpu.memory_space<vmem>>) attributes {dimension_semantics = [#tpu.dimension_semantics<parallel>], iteration_bounds = array<i64: 2>, scalar_prefetch = 0 : i64, scratch_operands = 0 : i64, tpu.core_type = #tpu.core_type<tc>, window_params = [{transform_indices = @transform_0, window_bounds = array<i64: 1, 8, 342>}, {pipeline_mode = #tpu.pipeline_mode<synchronous>, transform_indices = @transform_1, window_bounds = array<i64: 9, 8, 8>}, {pipeline_mode = #tpu.pipeline_mode<synchronous>, transform_indices = @transform_2, window_bounds = array<i64: 8, 1>}, {transform_indices = @transform_3, window_bounds = array<i64: 1, 8, 288>}]} {
    %cst = arith.constant 0.000000e+00 : f32
    %0 = vector.broadcast %cst : f32 to vector<8x288xf32>
    %c0 = arith.constant 0 : index
    %c0_0 = arith.constant 0 : index
    %c0_1 = arith.constant 0 : index
    %1 = vector.load %arg2[%c0, %c0_0, %c0_1] : memref<9x8x8xf32, #tpu.memory_space<vmem>>, vector<1x8x8xf32>
    %2 = vector.shape_cast %1 : vector<1x8x8xf32> to vector<8x8xf32>
    %c0_2 = arith.constant 0 : index
    %c0_3 = arith.constant 0 : index
    %c0_4 = arith.constant 0 : index
    %3 = vector.load %arg1[%c0_2, %c0_3, %c0_4] : memref<1x8x342xf32, #tpu.memory_space<vmem>>, vector<1x8x288xf32>
    %4 = vector.shape_cast %3 : vector<1x8x288xf32> to vector<8x288xf32>
    %cst_5 = arith.constant dense<0.000000e+00> : vector<8x288xf32>
    %5 = tpu.matmul %2, %4, %cst_5 {dimension_numbers = #tpu.dot_dimension_numbers<[1], [0], [0], [1], [0, 0, 1, 1], [], []>} : vector<8x8xf32>, vector<8x288xf32>, vector<8x288xf32> -> vector<8x288xf32>
    %6 = arith.addf %0, %5 : vector<8x288xf32>
    %c1 = arith.constant 1 : index
    %c0_6 = arith.constant 0 : index
    %c0_7 = arith.constant 0 : index
    %7 = vector.load %arg2[%c1, %c0_6, %c0_7] : memref<9x8x8xf32, #tpu.memory_space<vmem>>, vector<1x8x8xf32>
    %8 = vector.shape_cast %7 : vector<1x8x8xf32> to vector<8x8xf32>
    %c0_8 = arith.constant 0 : index
    %c0_9 = arith.constant 0 : index
    %c1_10 = arith.constant 1 : index
    %9 = vector.load %arg1[%c0_8, %c0_9, %c1_10] : memref<1x8x342xf32, #tpu.memory_space<vmem>>, vector<1x8x288xf32>
    %10 = vector.shape_cast %9 : vector<1x8x288xf32> to vector<8x288xf32>
    %cst_11 = arith.constant dense<0.000000e+00> : vector<8x288xf32>
    %11 = tpu.matmul %8, %10, %cst_11 {dimension_numbers = #tpu.dot_dimension_numbers<[1], [0], [0], [1], [0, 0, 1, 1], [], []>} : vector<8x8xf32>, vector<8x288xf32>, vector<8x288xf32> -> vector<8x288xf32>
    %12 = arith.addf %6, %11 : vector<8x288xf32>
    %c2 = arith.constant 2 : index
    %c0_12 = arith.constant 0 : index
    %c0_13 = arith.constant 0 : index
    %13 = vector.load %arg2[%c2, %c0_12, %c0_13] : memref<9x8x8xf32, #tpu.memory_space<vmem>>, vector<1x8x8xf32>
    %14 = vector.shape_cast %13 : vector<1x8x8xf32> to vector<8x8xf32>
    %c0_14 = arith.constant 0 : index
    %c0_15 = arith.constant 0 : index
    %c2_16 = arith.constant 2 : index
    %15 = vector.load %arg1[%c0_14, %c0_15, %c2_16] : memref<1x8x342xf32, #tpu.memory_space<vmem>>, vector<1x8x288xf32>
    %16 = vector.shape_cast %15 : vector<1x8x288xf32> to vector<8x288xf32>
    %cst_17 = arith.constant dense<0.000000e+00> : vector<8x288xf32>
    %17 = tpu.matmul %14, %16, %cst_17 {dimension_numbers = #tpu.dot_dimension_numbers<[1], [0], [0], [1], [0, 0, 1, 1], [], []>} : vector<8x8xf32>, vector<8x288xf32>, vector<8x288xf32> -> vector<8x288xf32>
    %18 = arith.addf %12, %17 : vector<8x288xf32>
    %c3 = arith.constant 3 : index
    %c0_18 = arith.constant 0 : index
    %c0_19 = arith.constant 0 : index
    %19 = vector.load %arg2[%c3, %c0_18, %c0_19] : memref<9x8x8xf32, #tpu.memory_space<vmem>>, vector<1x8x8xf32>
    %20 = vector.shape_cast %19 : vector<1x8x8xf32> to vector<8x8xf32>
    %c0_20 = arith.constant 0 : index
    %c0_21 = arith.constant 0 : index
    %c18 = arith.constant 18 : index
    %21 = vector.load %arg1[%c0_20, %c0_21, %c18] : memref<1x8x342xf32, #tpu.memory_space<vmem>>, vector<1x8x288xf32>
    %22 = vector.shape_cast %21 : vector<1x8x288xf32> to vector<8x288xf32>
    %cst_22 = arith.constant dense<0.000000e+00> : vector<8x288xf32>
    %23 = tpu.matmul %20, %22, %cst_22 {dimension_numbers = #tpu.dot_dimension_numbers<[1], [0], [0], [1], [0, 0, 1, 1], [], []>} : vector<8x8xf32>, vector<8x288xf32>, vector<8x288xf32> -> vector<8x288xf32>
    %24 = arith.addf %18, %23 : vector<8x288xf32>
    %c4 = arith.constant 4 : index
    %c0_23 = arith.constant 0 : index
    %c0_24 = arith.constant 0 : index
    %25 = vector.load %arg2[%c4, %c0_23, %c0_24] : memref<9x8x8xf32, #tpu.memory_space<vmem>>, vector<1x8x8xf32>
    %26 = vector.shape_cast %25 : vector<1x8x8xf32> to vector<8x8xf32>
    %c0_25 = arith.constant 0 : index
    %c0_26 = arith.constant 0 : index
    %c19 = arith.constant 19 : index
    %27 = vector.load %arg1[%c0_25, %c0_26, %c19] : memref<1x8x342xf32, #tpu.memory_space<vmem>>, vector<1x8x288xf32>
    %28 = vector.shape_cast %27 : vector<1x8x288xf32> to vector<8x288xf32>
    %cst_27 = arith.constant dense<0.000000e+00> : vector<8x288xf32>
    %29 = tpu.matmul %26, %28, %cst_27 {dimension_numbers = #tpu.dot_dimension_numbers<[1], [0], [0], [1], [0, 0, 1, 1], [], []>} : vector<8x8xf32>, vector<8x288xf32>, vector<8x288xf32> -> vector<8x288xf32>
    %30 = arith.addf %24, %29 : vector<8x288xf32>
    %c5 = arith.constant 5 : index
    %c0_28 = arith.constant 0 : index
    %c0_29 = arith.constant 0 : index
    %31 = vector.load %arg2[%c5, %c0_28, %c0_29] : memref<9x8x8xf32, #tpu.memory_space<vmem>>, vector<1x8x8xf32>
    %32 = vector.shape_cast %31 : vector<1x8x8xf32> to vector<8x8xf32>
    %c0_30 = arith.constant 0 : index
    %c0_31 = arith.constant 0 : index
    %c20 = arith.constant 20 : index
    %33 = vector.load %arg1[%c0_30, %c0_31, %c20] : memref<1x8x342xf32, #tpu.memory_space<vmem>>, vector<1x8x288xf32>
    %34 = vector.shape_cast %33 : vector<1x8x288xf32> to vector<8x288xf32>
    %cst_32 = arith.constant dense<0.000000e+00> : vector<8x288xf32>
    %35 = tpu.matmul %32, %34, %cst_32 {dimension_numbers = #tpu.dot_dimension_numbers<[1], [0], [0], [1], [0, 0, 1, 1], [], []>} : vector<8x8xf32>, vector<8x288xf32>, vector<8x288xf32> -> vector<8x288xf32>
    %36 = arith.addf %30, %35 : vector<8x288xf32>
    %c6 = arith.constant 6 : index
    %c0_33 = arith.constant 0 : index
    %c0_34 = arith.constant 0 : index
    %37 = vector.load %arg2[%c6, %c0_33, %c0_34] : memref<9x8x8xf32, #tpu.memory_space<vmem>>, vector<1x8x8xf32>
    %38 = vector.shape_cast %37 : vector<1x8x8xf32> to vector<8x8xf32>
    %c0_35 = arith.constant 0 : index
    %c0_36 = arith.constant 0 : index
    %c36 = arith.constant 36 : index
    %39 = vector.load %arg1[%c0_35, %c0_36, %c36] : memref<1x8x342xf32, #tpu.memory_space<vmem>>, vector<1x8x288xf32>
    %40 = vector.shape_cast %39 : vector<1x8x288xf32> to vector<8x288xf32>
    %cst_37 = arith.constant dense<0.000000e+00> : vector<8x288xf32>
    %41 = tpu.matmul %38, %40, %cst_37 {dimension_numbers = #tpu.dot_dimension_numbers<[1], [0], [0], [1], [0, 0, 1, 1], [], []>} : vector<8x8xf32>, vector<8x288xf32>, vector<8x288xf32> -> vector<8x288xf32>
    %42 = arith.addf %36, %41 : vector<8x288xf32>
    %c7 = arith.constant 7 : index
    %c0_38 = arith.constant 0 : index
    %c0_39 = arith.constant 0 : index
    %43 = vector.load %arg2[%c7, %c0_38, %c0_39] : memref<9x8x8xf32, #tpu.memory_space<vmem>>, vector<1x8x8xf32>
    %44 = vector.shape_cast %43 : vector<1x8x8xf32> to vector<8x8xf32>
    %c0_40 = arith.constant 0 : index
    %c0_41 = arith.constant 0 : index
    %c37 = arith.constant 37 : index
    %45 = vector.load %arg1[%c0_40, %c0_41, %c37] : memref<1x8x342xf32, #tpu.memory_space<vmem>>, vector<1x8x288xf32>
    %46 = vector.shape_cast %45 : vector<1x8x288xf32> to vector<8x288xf32>
    %cst_42 = arith.constant dense<0.000000e+00> : vector<8x288xf32>
    %47 = tpu.matmul %44, %46, %cst_42 {dimension_numbers = #tpu.dot_dimension_numbers<[1], [0], [0], [1], [0, 0, 1, 1], [], []>} : vector<8x8xf32>, vector<8x288xf32>, vector<8x288xf32> -> vector<8x288xf32>
    %48 = arith.addf %42, %47 : vector<8x288xf32>
    %c8 = arith.constant 8 : index
    %c0_43 = arith.constant 0 : index
    %c0_44 = arith.constant 0 : index
    %49 = vector.load %arg2[%c8, %c0_43, %c0_44] : memref<9x8x8xf32, #tpu.memory_space<vmem>>, vector<1x8x8xf32>
    %50 = vector.shape_cast %49 : vector<1x8x8xf32> to vector<8x8xf32>
    %c0_45 = arith.constant 0 : index
    %c0_46 = arith.constant 0 : index
    %c38 = arith.constant 38 : index
    %51 = vector.load %arg1[%c0_45, %c0_46, %c38] : memref<1x8x342xf32, #tpu.memory_space<vmem>>, vector<1x8x288xf32>
    %52 = vector.shape_cast %51 : vector<1x8x288xf32> to vector<8x288xf32>
    %cst_47 = arith.constant dense<0.000000e+00> : vector<8x288xf32>
    %53 = tpu.matmul %50, %52, %cst_47 {dimension_numbers = #tpu.dot_dimension_numbers<[1], [0], [0], [1], [0, 0, 1, 1], [], []>} : vector<8x8xf32>, vector<8x288xf32>, vector<8x288xf32> -> vector<8x288xf32>
    %54 = arith.addf %48, %53 : vector<8x288xf32>
    %c0_48 = arith.constant 0 : index
    %c0_49 = arith.constant 0 : index
    %55 = vector.load %arg3[%c0_48, %c0_49] : memref<8x1xf32, #tpu.memory_space<vmem>>, vector<8x1xf32>
    %56 = vector.broadcast %55 : vector<8x1xf32> to vector<8x288xf32>
    %57 = arith.addf %54, %56 : vector<8x288xf32>
    %c0_50 = arith.constant 0 : index
    %c0_51 = arith.constant 0 : index
    %c0_52 = arith.constant 0 : index
    %58 = vector.load %arg4[%c0_50, %c0_51, %c0_52] : memref<1x8x288xf32, #tpu.memory_space<vmem>>, vector<1x8x288xf32>
    %59 = vector.shape_cast %58 : vector<1x8x288xf32> to vector<8x288xf32>
    %60 = vector.shape_cast %57 : vector<8x288xf32> to vector<1x8x288xf32>
    tpu.vector_store %arg4[%c0_50, %c0_51, %c0_52], %60 {strides = array<i32>} : memref<1x8x288xf32, #tpu.memory_space<vmem>>, vector<1x8x288xf32>,
    return
  }
  func.func @transform_0(%arg0: i32) -> (i32, i32, i32) {
    %c0_i32 = arith.constant 0 : i32
    %c0_i32_0 = arith.constant 0 : i32
    %c0_i32_1 = arith.constant 0 : i32
    return %arg0, %c0_i32, %c0_i32_0 : i32, i32, i32
  }
  func.func @transform_1(%arg0: i32) -> (i32, i32, i32) {
    %c0_i32 = arith.constant 0 : i32
    %c0_i32_0 = arith.constant 0 : i32
    %c0_i32_1 = arith.constant 0 : i32
    %c0_i32_2 = arith.constant 0 : i32
    return %c0_i32, %c0_i32_0, %c0_i32_1 : i32, i32, i32
  }
  func.func @transform_2(%arg0: i32) -> (i32, i32) {
    %c0_i32 = arith.constant 0 : i32
    %c0_i32_0 = arith.constant 0 : i32
    %c0_i32_1 = arith.constant 0 : i32
    return %c0_i32, %c0_i32_0 : i32, i32
  }
  func.func @transform_3(%arg0: i32) -> (i32, i32, i32) {
    %c0_i32 = arith.constant 0 : i32
    %c0_i32_0 = arith.constant 0 : i32
    %c0_i32_1 = arith.constant 0 : i32
    return %arg0, %c0_i32, %c0_i32_0 : i32, i32, i32
  }
}

</mosaic_0001>

<llo_original>
// kernel: _lambda_.1
$region0: #{_lambda_.1}
  #allocation0 [shape = 'u32[]', space=smem, size = 0x4, offset = 0x4, fixed_abs, tag = 'smem constant byte address 0x4 - core index']
  #allocation1 [shape = 'u32[144,128]{1,0:T(1,128)}', space=vmem, size = 0x12000, scoped, tag = 'internal scratch']
  %s0 = inlined_call_operand.vmem [shape: f32[2,8,342], index: 0, kind: input, shape index: {}]
  %s1 = inlined_call_operand.vmem [shape: f32[9,8,8], index: 1, kind: input, shape index: {}]
  %s2 = inlined_call_operand.vmem [shape: f32[8,1], index: 2, kind: input, shape index: {}]
  %s3 = inlined_call_operand.vmem [shape: f32[2,8,288], index: 3, kind: output, shape index: {}]
  %s4 = sld [smem:[#allocation0]]
  $region45: #{_lambda_.1} parent=0
    _
  %s6 = ssub.s32 1, %s4
  %s7 = scalar_select 0, %s6, %s4
  loop: start=0, step=1, limit=4
  $region2: #{_lambda_.1} parent=0 // loop_pre_header
    _
  $region3: #{_lambda_.1} parent=0 // loop_header
    %s9 = sphi 0, %s13
    %p10 = scmp.ge.s32.totalorder %s9, 4
    %s19 = sphi 0, %s21
    %s22 = sphi 0, %s19
    %s23 = sphi 0, %s22
    %s39 = sphi 0, %s23
    %s43 = sphi 0, %s43
    %s45 = sphi 0, %s43
    %s46 = sphi 0, %s45
    %s60 = sphi 0, %s46
    %s64 = sphi 0, %s64
    %s66 = sphi 0, %s64
    %s67 = sphi 0, %s66
    %s81 = sphi 0, %s67
    %s87 = sphi 0, %s89
    %s90 = sphi 0, %s87
    %s91 = sphi 0, %s90
    %s107 = sphi 0, %s91
  $region4: #{_lambda_.1} parent=0 // loop_header_branch
    %12 = sbr.rel (%p10) target = $region8
  $region5: #{_lambda_.1} parent=0 // loop_body
    %s14 = ssub.s32 %s9, 1
    %s15 = ssub.s32 %s9, 2
    %s16 = sadd.s32 %s9, 1
    %s17 = ssub.s32 %s9, %s16
    %p18 = scmp.eq.s32.totalorder %s17, 0
    %s20 = sadd.s32 %s19, 1
    %s21 = scalar_select %p18, %s19, %s20
    %p24 = pneg %p18
    %p25 = scmp.eq.s32.totalorder %s9, 1
    %p26 = por %p24, %p25
    %p27 = scmp.ne.s32.totalorder %s19, %s22
    %p28 = scmp.eq.s32.totalorder %s9, 0
    %p29 = por %p27, %p28
    %p30 = scmp.ne.s32.totalorder %s19, %s22
    %p31 = scmp.eq.s32.totalorder %s14, 1
    %p32 = por %p30, %p31
    %p33 = scmp.ne.s32.totalorder %s22, %s23
    %p34 = scmp.eq.s32.totalorder %s14, 0
    %p35 = por %p33, %p34
    %p36 = scmp.ne.s32.totalorder %s22, %s23
    %p37 = scmp.eq.s32.totalorder %s15, 1
    %p38 = por %p36, %p37
    %p40 = scmp.ne.s32.totalorder %s23, %s39
    %p41 = scmp.eq.s32.totalorder %s15, 0
    %p42 = por %p40, %p41
    %s44 = sadd.s32 %s43, 1
    %p47 = scmp.eq.s32.totalorder %s9, 1
    %p48 = scmp.ne.s32.totalorder %s43, %s45
    %p49 = scmp.eq.s32.totalorder %s9, 0
    %p50 = por %p48, %p49
    %p51 = scmp.ne.s32.totalorder %s43, %s45
    %p52 = scmp.eq.s32.totalorder %s14, 1
    %p53 = por %p51, %p52
    %p54 = scmp.ne.s32.totalorder %s45, %s46
    %p55 = scmp.eq.s32.totalorder %s14, 0
    %p56 = por %p54, %p55
    %p57 = scmp.ne.s32.totalorder %s45, %s46
    %p58 = scmp.eq.s32.totalorder %s15, 1
    %p59 = por %p57, %p58
    %p61 = scmp.ne.s32.totalorder %s46, %s60
    %p62 = scmp.eq.s32.totalorder %s15, 0
    %p63 = por %p61, %p62
    %s65 = sadd.s32 %s64, 1
    %p68 = scmp.eq.s32.totalorder %s9, 1
    %p69 = scmp.ne.s32.totalorder %s64, %s66
    %p70 = scmp.eq.s32.totalorder %s9, 0
    %p71 = por %p69, %p70
    %p72 = scmp.ne.s32.totalorder %s64, %s66
    %p73 = scmp.eq.s32.totalorder %s14, 1
    %p74 = por %p72, %p73
    %p75 = scmp.ne.s32.totalorder %s66, %s67
    %p76 = scmp.eq.s32.totalorder %s14, 0
    %p77 = por %p75, %p76
    %p78 = scmp.ne.s32.totalorder %s66, %s67
    %p79 = scmp.eq.s32.totalorder %s15, 1
    %p80 = por %p78, %p79
    %p82 = scmp.ne.s32.totalorder %s67, %s81
    %p83 = scmp.eq.s32.totalorder %s15, 0
    %p84 = por %p82, %p83
    %s85 = ssub.s32 %s9, %s16
    %p86 = scmp.eq.s32.totalorder %s85, 0
    %s88 = sadd.s32 %s87, 1
    %s89 = scalar_select %p86, %s87, %s88
    %p92 = pneg %p86
    %p93 = scmp.eq.s32.totalorder %s9, 1
    %p94 = por %p92, %p93
    %p95 = scmp.ne.s32.totalorder %s87, %s90
    %p96 = scmp.eq.s32.totalorder %s9, 0
    %p97 = por %p95, %p96
    %p98 = scmp.ne.s32.totalorder %s87, %s90
    %p99 = scmp.eq.s32.totalorder %s14, 1
    %p100 = por %p98, %p99
    %p101 = scmp.ne.s32.totalorder %s90, %s91
    %p102 = scmp.eq.s32.totalorder %s14, 0
    %p103 = por %p101, %p102
    %p104 = scmp.ne.s32.totalorder %s90, %s91
    %p105 = scmp.eq.s32.totalorder %s15, 1
    %p106 = por %p104, %p105
    %p108 = scmp.ne.s32.totalorder %s91, %s107
    %p109 = scmp.eq.s32.totalorder %s15, 0
    %p110 = por %p108, %p109
    %p111 = scmp.le.s32.totalorder 1, %s9
    %p112 = scmp.lt.s32.totalorder %s9, 3
    %p113 = pnand %p111, %p112
    %p114 = pneg %p113
    // Predicated region
    $region9: #{_lambda_.1} parent=5 // pred_check
      _
    $region10: #{_lambda_.1} parent=5 // pred_check_branch
      %116 = sbr.rel (%p113) target = $region12
    $region11: #{_lambda_.1} parent=5 // pred_region
      %s117 = ssub.s32 %s9, 1
      // Predicated region
      $region13: #{_lambda_.1} parent=11 // pred_check
        %p118 = pneg %p56
      $region14: #{_lambda_.1} parent=11 // pred_check_branch
        %120 = sbr.rel (%p118) target = $region16
      $region15: #{_lambda_.1} parent=11 // pred_region
        _
      $region16: #{_lambda_.1} parent=11 // pred_fallthru
        _
      // Predicated region
      $region17: #{_lambda_.1} parent=11 // pred_check
        %p121 = pneg %p77
      $region18: #{_lambda_.1} parent=11 // pred_check_branch
        %123 = sbr.rel (%p121) target = $region20
      $region19: #{_lambda_.1} parent=11 // pred_region
        _
      $region20: #{_lambda_.1} parent=11 // pred_fallthru
        _
    $region12: #{_lambda_.1} parent=5 // pred_fallthru
      _
    %p124 = scmp.lt.s32.totalorder %s9, 2
    // Predicated region
    $region21: #{_lambda_.1} parent=5 // pred_check
      %p125 = pneg %p124
    $region22: #{_lambda_.1} parent=5 // pred_check_branch
      %127 = sbr.rel (%p125) target = $region24
    $region23: #{_lambda_.1} parent=5 // pred_region
      // Predicated region
      $region25: #{_lambda_.1} parent=23 // pred_check
        %p128 = pneg %p29
      $region26: #{_lambda_.1} parent=23 // pred_check_branch
        %130 = sbr.rel (%p128) target = $region28
      $region27: #{_lambda_.1} parent=23 // pred_region
        %p131 = scmp.lt.s32.totalorder %s9, 1
        %s132 = scalar_select %p131, %s9, 1
        %s133 = smul.addr %s132, 3
        %s134 = smul.addr %s133, 8
        %s135 = scalar_lea.vmem %s0, %s134
      $region28: #{_lambda_.1} parent=23 // pred_fallthru
        _
    $region24: #{_lambda_.1} parent=5 // pred_fallthru
      _
    %p136 = scmp.le.s32.totalorder 1, %s9
    %p137 = scmp.lt.s32.totalorder %s9, 3
    %p138 = pnand %p136, %p137
    %p139 = pneg %p138
    // Predicated region
    $region29: #{_lambda_.1} parent=5 // pred_check
      _
    $region30: #{_lambda_.1} parent=5 // pred_check_branch
      %141 = sbr.rel (%p138) target = $region32
    $region31: #{_lambda_.1} parent=5 // pred_region
      %s142 = ssub.s32 %s9, 1
      %p143 = scmp.lt.s32.totalorder %s14, 1
      %s144 = scalar_select %p143, %s14, 1
      %s145 = smul.addr %s144, 3
      %s146 = smul.addr %s145, 8
      %s147 = scalar_lea.vmem %s0, %s146
      %p148 = pneg %p35
      %p149 = pneg %p32
      %p150 = pneg %p56
      %p151 = pneg %p53
      %p152 = pneg %p77
      %p153 = pneg %p74
      %p154 = pneg %p103
      %p155 = pneg %p100
      %p156 = scmp.lt.s32.totalorder %s14, 1
      %s157 = scalar_select %p156, %s14, 1
      %s158 = smul.addr %s157, 3
      %s159 = smul.addr %s158, 8
      %s160 = scalar_lea.vmem %s3, %s159
      %p161 = scmp.lt.s32.totalorder %s14, 1
      %s162 = scalar_select %p161, %s14, 1
      %s163 = smul.addr %s162, 3
      %s164 = smul.addr %s163, 8
      %s165 = scalar_lea.vmem %s0, %s164
      %p166 = scmp.lt.s32.totalorder %s14, 1
      %s167 = scalar_select %p166, %s14, 1
      %s168 = smul.addr %s167, 3
      %s169 = smul.addr %s168, 8
      %s170 = scalar_lea.vmem %s3, %s169
      %v171 = vld [vmem:[%s1] sm:$0xff]
      %v172 = vld [vmem:[%s165] sm:$0xff]
      %v173 = vld [vmem:[%s165 + $0x8] sm:$0xff]
      %v174 = vld [vmem:[%s165 + $0x10] sm:$0xff]
      %s175 = scalar_lea.vmem %s1, 8
      %v176 = vld [vmem:[%s175] sm:$0xff]
      %180 = vrot.lane.b32.xlu0 %v172, 127
      %v181 = vpop.permute.xlu0 %180
      %182 = vrot.lane.b32.xlu0 %v173, 127
      %v183 = vpop.permute.xlu0 %182
      %184 = vrot.lane.b32.xlu0 %v174, 127
      %v185 = vpop.permute.xlu0 %184
      %vm186 = vcmask 1039360
      %v187 = vsel %vm186, %v181, %v183
      %v188 = vsel %vm186, %v183, %v185
      %vm192 = vcmask 64512
      %v194 = vsel %vm192, %v176, 0
      %196 = vmatprep.subr.mxu0 0.0
      %197 = vmatpush1.msra.mxu0 0.0
      %198 = vmatprep.subr.mxu0 0.0
      %199 = vmatpush1.msra.mxu0 0.0
      %200 = vmatprep.subr.mxu0 0.0
      %201 = vmatpush1.msra.mxu0 0.0
      %202 = vmatprep.subr.mxu0 0.0
      %203 = vmatpush1.msra.mxu0 0.0
      %204 = vmatprep.subr.mxu0 0.0
      %205 = vmatpush1.msra.mxu0 0.0
      %206 = vmatprep.subr.mxu0 0.0
      %207 = vmatpush1.msra.mxu0 0.0
      %208 = vmatprep.subr.mxu0 0.0
      %209 = vmatpush1.msra.mxu0 0.0
      %210 = vmatprep.subr.mxu0 0.0
      %211 = vmatpush1.msra.mxu0 0.0
      %212 = vmatprep.subr.mxu0 0.0
      %213 = vmatpush1.msra.mxu0 0.0
      %214 = vmatprep.subr.mxu0 0.0
      %215 = vmatpush1.msra.mxu0 0.0
      %216 = vmatprep.subr.mxu0 0.0
      %217 = vmatpush1.msra.mxu0 0.0
      %218 = vmatprep.subr.mxu0 0.0
      %219 = vmatpush1.msra.mxu0 0.0
      %220 = vmatprep.subr.mxu0 0.0
      %221 = vmatpush1.msra.mxu0 0.0
      %222 = vmatprep.subr.mxu0 0.0
      %223 = vmatpush1.msra.mxu0 0.0
      %224 = vmatprep.subr.mxu0 0.0
      %225 = vmatpush1.msra.mxu0 0.0
      %226 = vmatprep.subr.mxu0 %v188
      %227 = vmatpush1.msra.mxu0 %v187
      %228 = vmatprep.subr.mxu0 0.0
      %229 = vmatpush2.msra.mxu0 0.0
      %230 = vmatprep.subr.mxu0 0.0
      %231 = vmatpush2.msra.mxu0 0.0
      %232 = vmatprep.subr.mxu0 0.0
      %233 = vmatpush2.msra.mxu0 0.0
      %234 = vmatprep.subr.mxu0 0.0
      %235 = vmatpush2.msra.mxu0 0.0
      %236 = vmatprep.subr.mxu0 0.0
      %237 = vmatpush2.msra.mxu0 0.0
      %238 = vmatprep.subr.mxu0 0.0
      %239 = vmatpush2.msra.mxu0 0.0
      %240 = vmatprep.subr.mxu0 0.0
      %241 = vmatpush2.msra.mxu0 0.0
      %242 = vmatprep.subr.mxu0 0.0
      %243 = vmatpush2.msra.mxu0 0.0
      %244 = vmatprep.subr.mxu0 0.0
      %245 = vmatpush2.msra.mxu0 0.0
      %246 = vmatprep.subr.mxu0 0.0
      %247 = vmatpush2.msra.mxu0 0.0
      %248 = vmatprep.subr.mxu0 0.0
      %249 = vmatpush2.msra.mxu0 0.0
      %250 = vmatprep.subr.mxu0 0.0
      %251 = vmatpush2.msra.mxu0 0.0
      %252 = vmatprep.subr.mxu0 0.0
      %253 = vmatpush2.msra.mxu0 0.0
      %254 = vmatprep.subr.mxu0 0.0
      %255 = vmatpush2.msra.mxu0 0.0
      %256 = vmatprep.subr.mxu0 0.0
      %257 = vmatpush2.msra.mxu0 0.0
      %258 = vmatprep.subr.mxu0 0.0
      %259 = vmatpush2.msra.mxu0 0.0
      %260 = vmatprep.mubr.f32.mxu0 0.0
      %261 = vmatmul.mubr.f32.gmra.mxu0 %v194
      %v262 = vpop.f32.mrf.mxu0
      %v263 = vadd.f32 0.0, %v262
      %v264 = vpop.f32.mrf.mxu0
      %v265 = vadd.f32 0.0, %v264
      %266 = vdwg.mxu0
      %267 = vmatprep.subr.mxu0 0.0
      %268 = vmatpush1.msra.mxu0 0.0
      %269 = vmatprep.subr.mxu0 0.0
      %270 = vmatpush1.msra.mxu0 0.0
      %271 = vmatprep.subr.mxu0 0.0
      %272 = vmatpush1.msra.mxu0 0.0
      %273 = vmatprep.subr.mxu0 0.0
      %274 = vmatpush1.msra.mxu0 0.0
      %275 = vmatprep.subr.mxu0 0.0
      %276 = vmatpush1.msra.mxu0 0.0
      %277 = vmatprep.subr.mxu0 0.0
      %278 = vmatpush1.msra.mxu0 0.0
      %279 = vmatprep.subr.mxu0 0.0
      %280 = vmatpush1.msra.mxu0 0.0
      %281 = vmatprep.subr.mxu0 0.0
      %282 = vmatpush1.msra.mxu0 0.0
      %283 = vmatprep.subr.mxu0 0.0
      %284 = vmatpush1.msra.mxu0 0.0
      %285 = vmatprep.subr.mxu0 0.0
      %286 = vmatpush1.msra.mxu0 0.0
      %287 = vmatprep.subr.mxu0 0.0
      %288 = vmatpush1.msra.mxu0 0.0
      %289 = vmatprep.subr.mxu0 0.0
      %290 = vmatpush1.msra.mxu0 0.0
      %291 = vmatprep.subr.mxu0 0.0
      %292 = vmatpush1.msra.mxu0 0.0
      %293 = vmatprep.subr.mxu0 0.0
      %294 = vmatpush1.msra.mxu0 0.0
      %295 = vmatprep.subr.mxu0 0.0
      %296 = vmatpush1.msra.mxu0 0.0
      %297 = vmatprep.subr.mxu0 0.0
      %298 = vmatpush1.msra.mxu0 %v185
      %299 = vmatprep.subr.mxu0 0.0
      %300 = vmatpush2.msra.mxu0 0.0
      %301 = vmatprep.subr.mxu0 0.0
      %302 = vmatpush2.msra.mxu0 0.0
      %303 = vmatprep.subr.mxu0 0.0
      %304 = vmatpush2.msra.mxu0 0.0
      %305 = vmatprep.subr.mxu0 0.0
      %306 = vmatpush2.msra.mxu0 0.0
      %307 = vmatprep.subr.mxu0 0.0
      %308 = vmatpush2.msra.mxu0 0.0
      %309 = vmatprep.subr.mxu0 0.0
      %310 = vmatpush2.msra.mxu0 0.0
      %311 = vmatprep.subr.mxu0 0.0
      %312 = vmatpush2.msra.mxu0 0.0
      %313 = vmatprep.subr.mxu0 0.0
      %314 = vmatpush2.msra.mxu0 0.0
      %315 = vmatprep.subr.mxu0 0.0
      %316 = vmatpush2.msra.mxu0 0.0
      %317 = vmatprep.subr.mxu0 0.0
      %318 = vmatpush2.msra.mxu0 0.0
      %319 = vmatprep.subr.mxu0 0.0
      %320 = vmatpush2.msra.mxu0 0.0
      %321 = vmatprep.subr.mxu0 0.0
      %322 = vmatpush2.msra.mxu0 0.0
      %323 = vmatprep.subr.mxu0 0.0
      %324 = vmatpush2.msra.mxu0 0.0
      %325 = vmatprep.subr.mxu0 0.0
      %326 = vmatpush2.msra.mxu0 0.0
      %327 = vmatprep.subr.mxu0 0.0
      %328 = vmatpush2.msra.mxu0 0.0
      %329 = vmatprep.subr.mxu0 0.0
      %330 = vmatpush2.msra.mxu0 0.0
      %331 = vmatprep.mubr.f32.mxu0 0.0
      %332 = vmatmul.mubr.f32.gmra.mxu0 %v194
      %v333 = vpop.f32.mrf.mxu0
      %v334 = vadd.f32 0.0, %v333
      %v335 = vpop.f32.mrf.mxu0
      %336 = vdwg.mxu0
      %v338 = vsel %vm192, %v171, 0
      %340 = vmatprep.subr.mxu0 0.0
      %341 = vmatpush1.msra.mxu0 0.0
      %342 = vmatprep.subr.mxu0 0.0
      %343 = vmatpush1.msra.mxu0 0.0
      %344 = vmatprep.subr.mxu0 0.0
      %345 = vmatpush1.msra.mxu0 0.0
      %346 = vmatprep.subr.mxu0 0.0
      %347 = vmatpush1.msra.mxu0 0.0
      %348 = vmatprep.subr.mxu0 0.0
      %349 = vmatpush1.msra.mxu0 0.0
      %350 = vmatprep.subr.mxu0 0.0
      %351 = vmatpush1.msra.mxu0 0.0
      %352 = vmatprep.subr.mxu0 0.0
      %353 = vmatpush1.msra.mxu0 0.0
      %354 = vmatprep.subr.mxu0 0.0
      %355 = vmatpush1.msra.mxu0 0.0
      %356 = vmatprep.subr.mxu0 0.0
      %357 = vmatpush1.msra.mxu0 0.0
      %358 = vmatprep.subr.mxu0 0.0
      %359 = vmatpush1.msra.mxu0 0.0
      %360 = vmatprep.subr.mxu0 0.0
      %361 = vmatpush1.msra.mxu0 0.0
      %362 = vmatprep.subr.mxu0 0.0
      %363 = vmatpush1.msra.mxu0 0.0
      %364 = vmatprep.subr.mxu0 0.0
      %365 = vmatpush1.msra.mxu0 0.0
      %366 = vmatprep.subr.mxu0 0.0
      %367 = vmatpush1.msra.mxu0 0.0
      %368 = vmatprep.subr.mxu0 0.0
      %369 = vmatpush1.msra.mxu0 0.0
      %370 = vmatprep.subr.mxu0 %v173
      %371 = vmatpush1.msra.mxu0 %v172
      %372 = vmatprep.subr.mxu0 0.0
      %373 = vmatpush2.msra.mxu0 0.0
      %374 = vmatprep.subr.mxu0 0.0
      %375 = vmatpush2.msra.mxu0 0.0
      %376 = vmatprep.subr.mxu0 0.0
      %377 = vmatpush2.msra.mxu0 0.0
      %378 = vmatprep.subr.mxu0 0.0
      %379 = vmatpush2.msra.mxu0 0.0
      %380 = vmatprep.subr.mxu0 0.0
      %381 = vmatpush2.msra.mxu0 0.0
      %382 = vmatprep.subr.mxu0 0.0
      %383 = vmatpush2.msra.mxu0 0.0
      %384 = vmatprep.subr.mxu0 0.0
      %385 = vmatpush2.msra.mxu0 0.0
      %386 = vmatprep.subr.mxu0 0.0
      %387 = vmatpush2.msra.mxu0 0.0
      %388 = vmatprep.subr.mxu0 0.0
      %389 = vmatpush2.msra.mxu0 0.0
      %390 = vmatprep.subr.mxu0 0.0
      %391 = vmatpush2.msra.mxu0 0.0
      %392 = vmatprep.subr.mxu0 0.0
      %393 = vmatpush2.msra.mxu0 0.0
      %394 = vmatprep.subr.mxu0 0.0
      %395 = vmatpush2.msra.mxu0 0.0
      %396 = vmatprep.subr.mxu0 0.0
      %397 = vmatpush2.msra.mxu0 0.0
      %398 = vmatprep.subr.mxu0 0.0
      %399 = vmatpush2.msra.mxu0 0.0
      %400 = vmatprep.subr.mxu0 0.0
      %401 = vmatpush2.msra.mxu0 0.0
      %402 = vmatprep.subr.mxu0 0.0
      %403 = vmatpush2.msra.mxu0 0.0
      %404 = vmatprep.mubr.f32.mxu0 0.0
      %405 = vmatmul.mubr.f32.gmra.mxu0 %v338
      %v406 = vpop.f32.mrf.mxu0
      %v407 = vadd.f32 %v263, %v406
      %v408 = vpop.f32.mrf.mxu0
      %v409 = vadd.f32 %v265, %v408
      %410 = vdwg.mxu0
      %411 = vmatprep.subr.mxu0 0.0
      %412 = vmatpush1.msra.mxu0 0.0
      %413 = vmatprep.subr.mxu0 0.0
      %414 = vmatpush1.msra.mxu0 0.0
      %415 = vmatprep.subr.mxu0 0.0
      %416 = vmatpush1.msra.mxu0 0.0
      %417 = vmatprep.subr.mxu0 0.0
      %418 = vmatpush1.msra.mxu0 0.0
      %419 = vmatprep.subr.mxu0 0.0
      %420 = vmatpush1.msra.mxu0 0.0
      %421 = vmatprep.subr.mxu0 0.0
      %422 = vmatpush1.msra.mxu0 0.0
      %423 = vmatprep.subr.mxu0 0.0
      %424 = vmatpush1.msra.mxu0 0.0
      %425 = vmatprep.subr.mxu0 0.0
      %426 = vmatpush1.msra.mxu0 0.0
      %427 = vmatprep.subr.mxu0 0.0
      %428 = vmatpush1.msra.mxu0 0.0
      %429 = vmatprep.subr.mxu0 0.0
      %430 = vmatpush1.msra.mxu0 0.0
      %431 = vmatprep.subr.mxu0 0.0
      %432 = vmatpush1.msra.mxu0 0.0
      %433 = vmatprep.subr.mxu0 0.0
      %434 = vmatpush1.msra.mxu0 0.0
      %435 = vmatprep.subr.mxu0 0.0
      %436 = vmatpush1.msra.mxu0 0.0
      %437 = vmatprep.subr.mxu0 0.0
      %438 = vmatpush1.msra.mxu0 0.0
      %439 = vmatprep.subr.mxu0 0.0
      %440 = vmatpush1.msra.mxu0 0.0
      %441 = vmatprep.subr.mxu0 0.0
      %442 = vmatpush1.msra.mxu0 %v174
      %443 = vmatprep.subr.mxu0 0.0
      %444 = vmatpush2.msra.mxu0 0.0
      %445 = vmatprep.subr.mxu0 0.0
      %446 = vmatpush2.msra.mxu0 0.0
      %447 = vmatprep.subr.mxu0 0.0
      %448 = vmatpush2.msra.mxu0 0.0
      %449 = vmatprep.subr.mxu0 0.0
      %450 = vmatpush2.msra.mxu0 0.0
      %451 = vmatprep.subr.mxu0 0.0
      %452 = vmatpush2.msra.mxu0 0.0
      %453 = vmatprep.subr.mxu0 0.0
      %454 = vmatpush2.msra.mxu0 0.0
      %455 = vmatprep.subr.mxu0 0.0
      %456 = vmatpush2.msra.mxu0 0.0
      %457 = vmatprep.subr.mxu0 0.0
      %458 = vmatpush2.msra.mxu0 0.0
      %459 = vmatprep.subr.mxu0 0.0
      %460 = vmatpush2.msra.mxu0 0.0
      %461 = vmatprep.subr.mxu0 0.0
      %462 = vmatpush2.msra.mxu0 0.0
      %463 = vmatprep.subr.mxu0 0.0
      %464 = vmatpush2.msra.mxu0 0.0
      %465 = vmatprep.subr.mxu0 0.0
      %466 = vmatpush2.msra.mxu0 0.0
      %467 = vmatprep.subr.mxu0 0.0
      %468 = vmatpush2.msra.mxu0 0.0
      %469 = vmatprep.subr.mxu0 0.0
      %470 = vmatpush2.msra.mxu0 0.0
      %471 = vmatprep.subr.mxu0 0.0
      %472 = vmatpush2.msra.mxu0 0.0
      %473 = vmatprep.subr.mxu0 0.0
      %474 = vmatpush2.msra.mxu0 0.0
      %475 = vmatprep.mubr.f32.mxu0 0.0
      %476 = vmatmul.mubr.f32.gmra.mxu0 %v338
      %v477 = vpop.f32.mrf.mxu0
      %v478 = vadd.f32 %v334, %v477
      %v479 = vpop.f32.mrf.mxu0
      %480 = vdwg.mxu0
      %s481 = scalar_lea.vmem %s1, 16
      %v482 = vld [vmem:[%s481] sm:$0xff]
      %483 = vrot.lane.b32.xlu0 %v172, 126
      %v484 = vpop.permute.xlu0 %483
      %485 = vrot.lane.b32.xlu0 %v173, 126
      %v486 = vpop.permute.xlu0 %485
      %487 = vrot.lane.b32.xlu0 %v174, 126
      %v488 = vpop.permute.xlu0 %487
      %vm489 = vcmask 1031168
      %v490 = vsel %vm489, %v484, %v486
      %v491 = vsel %vm489, %v486, %v488
      %v496 = vsel %vm192, %v482, 0
      %498 = vmatprep.subr.mxu0 0.0
      %499 = vmatpush1.msra.mxu0 0.0
      %500 = vmatprep.subr.mxu0 0.0
      %501 = vmatpush1.msra.mxu0 0.0
      %502 = vmatprep.subr.mxu0 0.0
      %503 = vmatpush1.msra.mxu0 0.0
      %504 = vmatprep.subr.mxu0 0.0
      %505 = vmatpush1.msra.mxu0 0.0
      %506 = vmatprep.subr.mxu0 0.0
      %507 = vmatpush1.msra.mxu0 0.0
      %508 = vmatprep.subr.mxu0 0.0
      %509 = vmatpush1.msra.mxu0 0.0
      %510 = vmatprep.subr.mxu0 0.0
      %511 = vmatpush1.msra.mxu0 0.0
      %512 = vmatprep.subr.mxu0 0.0
      %513 = vmatpush1.msra.mxu0 0.0
      %514 = vmatprep.subr.mxu0 0.0
      %515 = vmatpush1.msra.mxu0 0.0
      %516 = vmatprep.subr.mxu0 0.0
      %517 = vmatpush1.msra.mxu0 0.0
      %518 = vmatprep.subr.mxu0 0.0
      %519 = vmatpush1.msra.mxu0 0.0
      %520 = vmatprep.subr.mxu0 0.0
      %521 = vmatpush1.msra.mxu0 0.0
      %522 = vmatprep.subr.mxu0 0.0
      %523 = vmatpush1.msra.mxu0 0.0
      %524 = vmatprep.subr.mxu0 0.0
      %525 = vmatpush1.msra.mxu0 0.0
      %526 = vmatprep.subr.mxu0 0.0
      %527 = vmatpush1.msra.mxu0 0.0
      %528 = vmatprep.subr.mxu0 %v491
      %529 = vmatpush1.msra.mxu0 %v490
      %530 = vmatprep.subr.mxu0 0.0
      %531 = vmatpush2.msra.mxu0 0.0
      %532 = vmatprep.subr.mxu0 0.0
      %533 = vmatpush2.msra.mxu0 0.0
      %534 = vmatprep.subr.mxu0 0.0
      %535 = vmatpush2.msra.mxu0 0.0
      %536 = vmatprep.subr.mxu0 0.0
      %537 = vmatpush2.msra.mxu0 0.0
      %538 = vmatprep.subr.mxu0 0.0
      %539 = vmatpush2.msra.mxu0 0.0
      %540 = vmatprep.subr.mxu0 0.0
      %541 = vmatpush2.msra.mxu0 0.0
      %542 = vmatprep.subr.mxu0 0.0
      %543 = vmatpush2.msra.mxu0 0.0
      %544 = vmatprep.subr.mxu0 0.0
      %545 = vmatpush2.msra.mxu0 0.0
      %546 = vmatprep.subr.mxu0 0.0
      %547 = vmatpush2.msra.mxu0 0.0
      %548 = vmatprep.subr.mxu0 0.0
      %549 = vmatpush2.msra.mxu0 0.0
      %550 = vmatprep.subr.mxu0 0.0
      %551 = vmatpush2.msra.mxu0 0.0
      %552 = vmatprep.subr.mxu0 0.0
      %553 = vmatpush2.msra.mxu0 0.0
      %554 = vmatprep.subr.mxu0 0.0
      %555 = vmatpush2.msra.mxu0 0.0
      %556 = vmatprep.subr.mxu0 0.0
      %557 = vmatpush2.msra.mxu0 0.0
      %558 = vmatprep.subr.mxu0 0.0
      %559 = vmatpush2.msra.mxu0 0.0
      %560 = vmatprep.subr.mxu0 0.0
      %561 = vmatpush2.msra.mxu0 0.0
      %562 = vmatprep.mubr.f32.mxu0 0.0
      %563 = vmatmul.mubr.f32.gmra.mxu0 %v496
      %v564 = vpop.f32.mrf.mxu0
      %v565 = vadd.f32 0.0, %v564
      %v566 = vpop.f32.mrf.mxu0
      %v567 = vadd.f32 0.0, %v566
      %568 = vdwg.mxu0
      %569 = vmatprep.subr.mxu0 0.0
      %570 = vmatpush1.msra.mxu0 0.0
      %571 = vmatprep.subr.mxu0 0.0
      %572 = vmatpush1.msra.mxu0 0.0
      %573 = vmatprep.subr.mxu0 0.0
      %574 = vmatpush1.msra.mxu0 0.0
      %575 = vmatprep.subr.mxu0 0.0
      %576 = vmatpush1.msra.mxu0 0.0
      %577 = vmatprep.subr.mxu0 0.0
      %578 = vmatpush1.msra.mxu0 0.0
      %579 = vmatprep.subr.mxu0 0.0
      %580 = vmatpush1.msra.mxu0 0.0
      %581 = vmatprep.subr.mxu0 0.0
      %582 = vmatpush1.msra.mxu0 0.0
      %583 = vmatprep.subr.mxu0 0.0
      %584 = vmatpush1.msra.mxu0 0.0
      %585 = vmatprep.subr.mxu0 0.0
      %586 = vmatpush1.msra.mxu0 0.0
      %587 = vmatprep.subr.mxu0 0.0
      %588 = vmatpush1.msra.mxu0 0.0
      %589 = vmatprep.subr.mxu0 0.0
      %590 = vmatpush1.msra.mxu0 0.0
      %591 = vmatprep.subr.mxu0 0.0
      %592 = vmatpush1.msra.mxu0 0.0
      %593 = vmatprep.subr.mxu0 0.0
      %594 = vmatpush1.msra.mxu0 0.0
      %595 = vmatprep.subr.mxu0 0.0
      %596 = vmatpush1.msra.mxu0 0.0
      %597 = vmatprep.subr.mxu0 0.0
      %598 = vmatpush1.msra.mxu0 0.0
      %599 = vmatprep.subr.mxu0 0.0
      %600 = vmatpush1.msra.mxu0 %v488
      %601 = vmatprep.subr.mxu0 0.0
      %602 = vmatpush2.msra.mxu0 0.0
      %603 = vmatprep.subr.mxu0 0.0
      %604 = vmatpush2.msra.mxu0 0.0
      %605 = vmatprep.subr.mxu0 0.0
      %606 = vmatpush2.msra.mxu0 0.0
      %607 = vmatprep.subr.mxu0 0.0
      %608 = vmatpush2.msra.mxu0 0.0
      %609 = vmatprep.subr.mxu0 0.0
      %610 = vmatpush2.msra.mxu0 0.0
      %611 = vmatprep.subr.mxu0 0.0
      %612 = vmatpush2.msra.mxu0 0.0
      %613 = vmatprep.subr.mxu0 0.0
      %614 = vmatpush2.msra.mxu0 0.0
      %615 = vmatprep.subr.mxu0 0.0
      %616 = vmatpush2.msra.mxu0 0.0
      %617 = vmatprep.subr.mxu0 0.0
      %618 = vmatpush2.msra.mxu0 0.0
      %619 = vmatprep.subr.mxu0 0.0
      %620 = vmatpush2.msra.mxu0 0.0
      %621 = vmatprep.subr.mxu0 0.0
      %622 = vmatpush2.msra.mxu0 0.0
      %623 = vmatprep.subr.mxu0 0.0
      %624 = vmatpush2.msra.mxu0 0.0
      %625 = vmatprep.subr.mxu0 0.0
      %626 = vmatpush2.msra.mxu0 0.0
      %627 = vmatprep.subr.mxu0 0.0
      %628 = vmatpush2.msra.mxu0 0.0
      %629 = vmatprep.subr.mxu0 0.0
      %630 = vmatpush2.msra.mxu0 0.0
      %631 = vmatprep.subr.mxu0 0.0
      %632 = vmatpush2.msra.mxu0 0.0
      %633 = vmatprep.mubr.f32.mxu0 0.0
      %634 = vmatmul.mubr.f32.gmra.mxu0 %v496
      %v635 = vpop.f32.mrf.mxu0
      %v636 = vadd.f32 0.0, %v635
      %v637 = vpop.f32.mrf.mxu0
      %638 = vdwg.mxu0
      %v639 = vadd.f32 %v407, %v565
      %v640 = vadd.f32 %v409, %v567
      %v641 = vadd.f32 %v478, %v636
      %s642 = scalar_lea.vmem %s1, 24
      %v643 = vld [vmem:[%s642] sm:$0xff]
      %644 = vrot.lane.b32.xlu0 %v172, 110
      %v645 = vpop.permute.xlu0 %644
      %646 = vrot.lane.b32.xlu0 %v173, 110
      %v647 = vpop.permute.xlu0 %646
      %648 = vrot.lane.b32.xlu0 %v174, 110
      %v649 = vpop.permute.xlu0 %648
      %vm650 = vcmask 900096
      %v651 = vsel %vm650, %v645, %v647
      %v652 = vsel %vm650, %v647, %v649
      %v657 = vsel %vm192, %v643, 0
      %659 = vmatprep.subr.mxu0 0.0
      %660 = vmatpush1.msra.mxu0 0.0
      %661 = vmatprep.subr.mxu0 0.0
      %662 = vmatpush1.msra.mxu0 0.0
      %663 = vmatprep.subr.mxu0 0.0
      %664 = vmatpush1.msra.mxu0 0.0
      %665 = vmatprep.subr.mxu0 0.0
      %666 = vmatpush1.msra.mxu0 0.0
      %667 = vmatprep.subr.mxu0 0.0
      %668 = vmatpush1.msra.mxu0 0.0
      %669 = vmatprep.subr.mxu0 0.0
      %670 = vmatpush1.msra.mxu0 0.0
      %671 = vmatprep.subr.mxu0 0.0
      %672 = vmatpush1.msra.mxu0 0.0
      %673 = vmatprep.subr.mxu0 0.0
      %674 = vmatpush1.msra.mxu0 0.0
      %675 = vmatprep.subr.mxu0 0.0
      %676 = vmatpush1.msra.mxu0 0.0
      %677 = vmatprep.subr.mxu0 0.0
      %678 = vmatpush1.msra.mxu0 0.0
      %679 = vmatprep.subr.mxu0 0.0
      %680 = vmatpush1.msra.mxu0 0.0
      %681 = vmatprep.subr.mxu0 0.0
      %682 = vmatpush1.msra.mxu0 0.0
      %683 = vmatprep.subr.mxu0 0.0
      %684 = vmatpush1.msra.mxu0 0.0
      %685 = vmatprep.subr.mxu0 0.0
      %686 = vmatpush1.msra.mxu0 0.0
      %687 = vmatprep.subr.mxu0 0.0
      %688 = vmatpush1.msra.mxu0 0.0
      %689 = vmatprep.subr.mxu0 %v652
      %690 = vmatpush1.msra.mxu0 %v651
      %691 = vmatprep.subr.mxu0 0.0
      %692 = vmatpush2.msra.mxu0 0.0
      %693 = vmatprep.subr.mxu0 0.0
      %694 = vmatpush2.msra.mxu0 0.0
      %695 = vmatprep.subr.mxu0 0.0
      %696 = vmatpush2.msra.mxu0 0.0
      %697 = vmatprep.subr.mxu0 0.0
      %698 = vmatpush2.msra.mxu0 0.0
      %699 = vmatprep.subr.mxu0 0.0
      %700 = vmatpush2.msra.mxu0 0.0
      %701 = vmatprep.subr.mxu0 0.0
      %702 = vmatpush2.msra.mxu0 0.0
      %703 = vmatprep.subr.mxu0 0.0
      %704 = vmatpush2.msra.mxu0 0.0
      %705 = vmatprep.subr.mxu0 0.0
      %706 = vmatpush2.msra.mxu0 0.0
      %707 = vmatprep.subr.mxu0 0.0
      %708 = vmatpush2.msra.mxu0 0.0
      %709 = vmatprep.subr.mxu0 0.0
      %710 = vmatpush2.msra.mxu0 0.0
      %711 = vmatprep.subr.mxu0 0.0
      %712 = vmatpush2.msra.mxu0 0.0
      %713 = vmatprep.subr.mxu0 0.0
      %714 = vmatpush2.msra.mxu0 0.0
      %715 = vmatprep.subr.mxu0 0.0
      %716 = vmatpush2.msra.mxu0 0.0
      %717 = vmatprep.subr.mxu0 0.0
      %718 = vmatpush2.msra.mxu0 0.0
      %719 = vmatprep.subr.mxu0 0.0
      %720 = vmatpush2.msra.mxu0 0.0
      %721 = vmatprep.subr.mxu0 0.0
      %722 = vmatpush2.msra.mxu0 0.0
      %723 = vmatprep.mubr.f32.mxu0 0.0
      %724 = vmatmul.mubr.f32.gmra.mxu0 %v657
      %v725 = vpop.f32.mrf.mxu0
      %v726 = vadd.f32 0.0, %v725
      %v727 = vpop.f32.mrf.mxu0
      %v728 = vadd.f32 0.0, %v727
      %729 = vdwg.mxu0
      %730 = vmatprep.subr.mxu0 0.0
      %731 = vmatpush1.msra.mxu0 0.0
      %732 = vmatprep.subr.mxu0 0.0
      %733 = vmatpush1.msra.mxu0 0.0
      %734 = vmatprep.subr.mxu0 0.0
      %735 = vmatpush1.msra.mxu0 0.0
      %736 = vmatprep.subr.mxu0 0.0
      %737 = vmatpush1.msra.mxu0 0.0
      %738 = vmatprep.subr.mxu0 0.0
      %739 = vmatpush1.msra.mxu0 0.0
      %740 = vmatprep.subr.mxu0 0.0
      %741 = vmatpush1.msra.mxu0 0.0
      %742 = vmatprep.subr.mxu0 0.0
      %743 = vmatpush1.msra.mxu0 0.0
      %744 = vmatprep.subr.mxu0 0.0
      %745 = vmatpush1.msra.mxu0 0.0
      %746 = vmatprep.subr.mxu0 0.0
      %747 = vmatpush1.msra.mxu0 0.0
      %748 = vmatprep.subr.mxu0 0.0
      %749 = vmatpush1.msra.mxu0 0.0
      %750 = vmatprep.subr.mxu0 0.0
      %751 = vmatpush1.msra.mxu0 0.0
      %752 = vmatprep.subr.mxu0 0.0
      %753 = vmatpush1.msra.mxu0 0.0
      %754 = vmatprep.subr.mxu0 0.0
      %755 = vmatpush1.msra.mxu0 0.0
      %756 = vmatprep.subr.mxu0 0.0
      %757 = vmatpush1.msra.mxu0 0.0
      %758 = vmatprep.subr.mxu0 0.0
      %759 = vmatpush1.msra.mxu0 0.0
      %760 = vmatprep.subr.mxu0 0.0
      %761 = vmatpush1.msra.mxu0 %v649
      %762 = vmatprep.subr.mxu0 0.0
      %763 = vmatpush2.msra.mxu0 0.0
      %764 = vmatprep.subr.mxu0 0.0
      %765 = vmatpush2.msra.mxu0 0.0
      %766 = vmatprep.subr.mxu0 0.0
      %767 = vmatpush2.msra.mxu0 0.0
      %768 = vmatprep.subr.mxu0 0.0
      %769 = vmatpush2.msra.mxu0 0.0
      %770 = vmatprep.subr.mxu0 0.0
      %771 = vmatpush2.msra.mxu0 0.0
      %772 = vmatprep.subr.mxu0 0.0
      %773 = vmatpush2.msra.mxu0 0.0
      %774 = vmatprep.subr.mxu0 0.0
      %775 = vmatpush2.msra.mxu0 0.0
      %776 = vmatprep.subr.mxu0 0.0
      %777 = vmatpush2.msra.mxu0 0.0
      %778 = vmatprep.subr.mxu0 0.0
      %779 = vmatpush2.msra.mxu0 0.0
      %780 = vmatprep.subr.mxu0 0.0
      %781 = vmatpush2.msra.mxu0 0.0
      %782 = vmatprep.subr.mxu0 0.0
      %783 = vmatpush2.msra.mxu0 0.0
      %784 = vmatprep.subr.mxu0 0.0
      %785 = vmatpush2.msra.mxu0 0.0
      %786 = vmatprep.subr.mxu0 0.0
      %787 = vmatpush2.msra.mxu0 0.0
      %788 = vmatprep.subr.mxu0 0.0
      %789 = vmatpush2.msra.mxu0 0.0
      %790 = vmatprep.subr.mxu0 0.0
      %791 = vmatpush2.msra.mxu0 0.0
      %792 = vmatprep.subr.mxu0 0.0
      %793 = vmatpush2.msra.mxu0 0.0
      %794 = vmatprep.mubr.f32.mxu0 0.0
      %795 = vmatmul.mubr.f32.gmra.mxu0 %v657
      %v796 = vpop.f32.mrf.mxu0
      %v797 = vadd.f32 0.0, %v796
      %v798 = vpop.f32.mrf.mxu0
      %799 = vdwg.mxu0
      %v800 = vadd.f32 %v639, %v726
      %v801 = vadd.f32 %v640, %v728
      %v802 = vadd.f32 %v641, %v797
      %s803 = scalar_lea.vmem %s1, 32
      %v804 = vld [vmem:[%s803] sm:$0xff]
      %805 = vrot.lane.b32.xlu0 %v172, 109
      %v806 = vpop.permute.xlu0 %805
      %807 = vrot.lane.b32.xlu0 %v173, 109
      %v808 = vpop.permute.xlu0 %807
      %809 = vrot.lane.b32.xlu0 %v174, 109
      %v810 = vpop.permute.xlu0 %809
      %vm811 = vcmask 891904
      %v812 = vsel %vm811, %v806, %v808
      %v813 = vsel %vm811, %v808, %v810
      %v818 = vsel %vm192, %v804, 0
      %820 = vmatprep.subr.mxu0 0.0
      %821 = vmatpush1.msra.mxu0 0.0
      %822 = vmatprep.subr.mxu0 0.0
      %823 = vmatpush1.msra.mxu0 0.0
      %824 = vmatprep.subr.mxu0 0.0
      %825 = vmatpush1.msra.mxu0 0.0
      %826 = vmatprep.subr.mxu0 0.0
      %827 = vmatpush1.msra.mxu0 0.0
      %828 = vmatprep.subr.mxu0 0.0
      %829 = vmatpush1.msra.mxu0 0.0
      %830 = vmatprep.subr.mxu0 0.0
      %831 = vmatpush1.msra.mxu0 0.0
      %832 = vmatprep.subr.mxu0 0.0
      %833 = vmatpush1.msra.mxu0 0.0
      %834 = vmatprep.subr.mxu0 0.0
      %835 = vmatpush1.msra.mxu0 0.0
      %836 = vmatprep.subr.mxu0 0.0
      %837 = vmatpush1.msra.mxu0 0.0
      %838 = vmatprep.subr.mxu0 0.0
      %839 = vmatpush1.msra.mxu0 0.0
      %840 = vmatprep.subr.mxu0 0.0
      %841 = vmatpush1.msra.mxu0 0.0
      %842 = vmatprep.subr.mxu0 0.0
      %843 = vmatpush1.msra.mxu0 0.0
      %844 = vmatprep.subr.mxu0 0.0
      %845 = vmatpush1.msra.mxu0 0.0
      %846 = vmatprep.subr.mxu0 0.0
      %847 = vmatpush1.msra.mxu0 0.0
      %848 = vmatprep.subr.mxu0 0.0
      %849 = vmatpush1.msra.mxu0 0.0
      %850 = vmatprep.subr.mxu0 %v813
      %851 = vmatpush1.msra.mxu0 %v812
      %852 = vmatprep.subr.mxu0 0.0
      %853 = vmatpush2.msra.mxu0 0.0
      %854 = vmatprep.subr.mxu0 0.0
      %855 = vmatpush2.msra.mxu0 0.0
      %856 = vmatprep.subr.mxu0 0.0
      %857 = vmatpush2.msra.mxu0 0.0
      %858 = vmatprep.subr.mxu0 0.0
      %859 = vmatpush2.msra.mxu0 0.0
      %860 = vmatprep.subr.mxu0 0.0
      %861 = vmatpush2.msra.mxu0 0.0
      %862 = vmatprep.subr.mxu0 0.0
      %863 = vmatpush2.msra.mxu0 0.0
      %864 = vmatprep.subr.mxu0 0.0
      %865 = vmatpush2.msra.mxu0 0.0
      %866 = vmatprep.subr.mxu0 0.0
      %867 = vmatpush2.msra.mxu0 0.0
      %868 = vmatprep.subr.mxu0 0.0
      %869 = vmatpush2.msra.mxu0 0.0
      %870 = vmatprep.subr.mxu0 0.0
      %871 = vmatpush2.msra.mxu0 0.0
      %872 = vmatprep.subr.mxu0 0.0
      %873 = vmatpush2.msra.mxu0 0.0
      %874 = vmatprep.subr.mxu0 0.0
      %875 = vmatpush2.msra.mxu0 0.0
      %876 = vmatprep.subr.mxu0 0.0
      %877 = vmatpush2.msra.mxu0 0.0
      %878 = vmatprep.subr.mxu0 0.0
      %879 = vmatpush2.msra.mxu0 0.0
      %880 = vmatprep.subr.mxu0 0.0
      %881 = vmatpush2.msra.mxu0 0.0
      %882 = vmatprep.subr.mxu0 0.0
      %883 = vmatpush2.msra.mxu0 0.0
      %884 = vmatprep.mubr.f32.mxu0 0.0
      %885 = vmatmul.mubr.f32.gmra.mxu0 %v818
      %v886 = vpop.f32.mrf.mxu0
      %v887 = vadd.f32 0.0, %v886
      %v888 = vpop.f32.mrf.mxu0
      %v889 = vadd.f32 0.0, %v888
      %890 = vdwg.mxu0
      %891 = vmatprep.subr.mxu0 0.0
      %892 = vmatpush1.msra.mxu0 0.0
      %893 = vmatprep.subr.mxu0 0.0
      %894 = vmatpush1.msra.mxu0 0.0
      %895 = vmatprep.subr.mxu0 0.0
      %896 = vmatpush1.msra.mxu0 0.0
      %897 = vmatprep.subr.mxu0 0.0
      %898 = vmatpush1.msra.mxu0 0.0
      %899 = vmatprep.subr.mxu0 0.0
      %900 = vmatpush1.msra.mxu0 0.0
      %901 = vmatprep.subr.mxu0 0.0
      %902 = vmatpush1.msra.mxu0 0.0
      %903 = vmatprep.subr.mxu0 0.0
      %904 = vmatpush1.msra.mxu0 0.0
      %905 = vmatprep.subr.mxu0 0.0
      %906 = vmatpush1.msra.mxu0 0.0
      %907 = vmatprep.subr.mxu0 0.0
      %908 = vmatpush1.msra.mxu0 0.0
      %909 = vmatprep.subr.mxu0 0.0
      %910 = vmatpush1.msra.mxu0 0.0
      %911 = vmatprep.subr.mxu0 0.0
      %912 = vmatpush1.msra.mxu0 0.0
      %913 = vmatprep.subr.mxu0 0.0
      %914 = vmatpush1.msra.mxu0 0.0
      %915 = vmatprep.subr.mxu0 0.0
      %916 = vmatpush1.msra.mxu0 0.0
      %917 = vmatprep.subr.mxu0 0.0
      %918 = vmatpush1.msra.mxu0 0.0
      %919 = vmatprep.subr.mxu0 0.0
      %920 = vmatpush1.msra.mxu0 0.0
      %921 = vmatprep.subr.mxu0 0.0
      %922 = vmatpush1.msra.mxu0 %v810
      %923 = vmatprep.subr.mxu0 0.0
      %924 = vmatpush2.msra.mxu0 0.0
      %925 = vmatprep.subr.mxu0 0.0
      %926 = vmatpush2.msra.mxu0 0.0
      %927 = vmatprep.subr.mxu0 0.0
      %928 = vmatpush2.msra.mxu0 0.0
      %929 = vmatprep.subr.mxu0 0.0
      %930 = vmatpush2.msra.mxu0 0.0
      %931 = vmatprep.subr.mxu0 0.0
      %932 = vmatpush2.msra.mxu0 0.0
      %933 = vmatprep.subr.mxu0 0.0
      %934 = vmatpush2.msra.mxu0 0.0
      %935 = vmatprep.subr.mxu0 0.0
      %936 = vmatpush2.msra.mxu0 0.0
      %937 = vmatprep.subr.mxu0 0.0
      %938 = vmatpush2.msra.mxu0 0.0
      %939 = vmatprep.subr.mxu0 0.0
      %940 = vmatpush2.msra.mxu0 0.0
      %941 = vmatprep.subr.mxu0 0.0
      %942 = vmatpush2.msra.mxu0 0.0
      %943 = vmatprep.subr.mxu0 0.0
      %944 = vmatpush2.msra.mxu0 0.0
      %945 = vmatprep.subr.mxu0 0.0
      %946 = vmatpush2.msra.mxu0 0.0
      %947 = vmatprep.subr.mxu0 0.0
      %948 = vmatpush2.msra.mxu0 0.0
      %949 = vmatprep.subr.mxu0 0.0
      %950 = vmatpush2.msra.mxu0 0.0
      %951 = vmatprep.subr.mxu0 0.0
      %952 = vmatpush2.msra.mxu0 0.0
      %953 = vmatprep.subr.mxu0 0.0
      %954 = vmatpush2.msra.mxu0 0.0
      %955 = vmatprep.mubr.f32.mxu0 0.0
      %956 = vmatmul.mubr.f32.gmra.mxu0 %v818
      %v957 = vpop.f32.mrf.mxu0
      %v958 = vadd.f32 0.0, %v957
      %v959 = vpop.f32.mrf.mxu0
      %960 = vdwg.mxu0
      %v961 = vadd.f32 %v800, %v887
      %v962 = vadd.f32 %v801, %v889
      %v963 = vadd.f32 %v802, %v958
      %s964 = scalar_lea.vmem %s1, 40
      %v965 = vld [vmem:[%s964] sm:$0xff]
      %966 = vrot.lane.b32.xlu0 %v172, 108
      %v967 = vpop.permute.xlu0 %966
      %968 = vrot.lane.b32.xlu0 %v173, 108
      %v969 = vpop.permute.xlu0 %968
      %970 = vrot.lane.b32.xlu0 %v174, 108
      %v971 = vpop.permute.xlu0 %970
      %vm972 = vcmask 883712
      %v973 = vsel %vm972, %v967, %v969
      %v974 = vsel %vm972, %v969, %v971
      %v979 = vsel %vm192, %v965, 0
      %981 = vmatprep.subr.mxu0 0.0
      %982 = vmatpush1.msra.mxu0 0.0
      %983 = vmatprep.subr.mxu0 0.0
      %984 = vmatpush1.msra.mxu0 0.0
      %985 = vmatprep.subr.mxu0 0.0
      %986 = vmatpush1.msra.mxu0 0.0
      %987 = vmatprep.subr.mxu0 0.0
      %988 = vmatpush1.msra.mxu0 0.0
      %989 = vmatprep.subr.mxu0 0.0
      %990 = vmatpush1.msra.mxu0 0.0
      %991 = vmatprep.subr.mxu0 0.0
      %992 = vmatpush1.msra.mxu0 0.0
      %993 = vmatprep.subr.mxu0 0.0
      %994 = vmatpush1.msra.mxu0 0.0
      %995 = vmatprep.subr.mxu0 0.0
      %996 = vmatpush1.msra.mxu0 0.0
      %997 = vmatprep.subr.mxu0 0.0
      %998 = vmatpush1.msra.mxu0 0.0
      %999 = vmatprep.subr.mxu0 0.0
      %1000 = vmatpush1.msra.mxu0 0.0
      %1001 = vmatprep.subr.mxu0 0.0
      %1002 = vmatpush1.msra.mxu0 0.0
      %1003 = vmatprep.subr.mxu0 0.0
      %1004 = vmatpush1.msra.mxu0 0.0
      %1005 = vmatprep.subr.mxu0 0.0
      %1006 = vmatpush1.msra.mxu0 0.0
      %1007 = vmatprep.subr.mxu0 0.0
      %1008 = vmatpush1.msra.mxu0 0.0
      %1009 = vmatprep.subr.mxu0 0.0
      %1010 = vmatpush1.msra.mxu0 0.0
      %1011 = vmatprep.subr.mxu0 %v974
      %1012 = vmatpush1.msra.mxu0 %v973
      %1013 = vmatprep.subr.mxu0 0.0
      %1014 = vmatpush2.msra.mxu0 0.0
      %1015 = vmatprep.subr.mxu0 0.0
      %1016 = vmatpush2.msra.mxu0 0.0
      %1017 = vmatprep.subr.mxu0 0.0
      %1018 = vmatpush2.msra.mxu0 0.0
      %1019 = vmatprep.subr.mxu0 0.0
      %1020 = vmatpush2.msra.mxu0 0.0
      %1021 = vmatprep.subr.mxu0 0.0
      %1022 = vmatpush2.msra.mxu0 0.0
      %1023 = vmatprep.subr.mxu0 0.0
      %1024 = vmatpush2.msra.mxu0 0.0
      %1025 = vmatprep.subr.mxu0 0.0
      %1026 = vmatpush2.msra.mxu0 0.0
      %1027 = vmatprep.subr.mxu0 0.0
      %1028 = vmatpush2.msra.mxu0 0.0
      %1029 = vmatprep.subr.mxu0 0.0
      %1030 = vmatpush2.msra.mxu0 0.0
      %1031 = vmatprep.subr.mxu0 0.0
      %1032 = vmatpush2.msra.mxu0 0.0
      %1033 = vmatprep.subr.mxu0 0.0
      %1034 = vmatpush2.msra.mxu0 0.0
      %1035 = vmatprep.subr.mxu0 0.0
      %1036 = vmatpush2.msra.mxu0 0.0
      %1037 = vmatprep.subr.mxu0 0.0
      %1038 = vmatpush2.msra.mxu0 0.0
      %1039 = vmatprep.subr.mxu0 0.0
      %1040 = vmatpush2.msra.mxu0 0.0
      %1041 = vmatprep.subr.mxu0 0.0
      %1042 = vmatpush2.msra.mxu0 0.0
      %1043 = vmatprep.subr.mxu0 0.0
      %1044 = vmatpush2.msra.mxu0 0.0
      %1045 = vmatprep.mubr.f32.mxu0 0.0
      %1046 = vmatmul.mubr.f32.gmra.mxu0 %v979
      %v1047 = vpop.f32.mrf.mxu0
      %v1048 = vadd.f32 0.0, %v1047
      %v1049 = vpop.f32.mrf.mxu0
      %v1050 = vadd.f32 0.0, %v1049
      %1051 = vdwg.mxu0
      %1052 = vmatprep.subr.mxu0 0.0
      %1053 = vmatpush1.msra.mxu0 0.0
      %1054 = vmatprep.subr.mxu0 0.0
      %1055 = vmatpush1.msra.mxu0 0.0
      %1056 = vmatprep.subr.mxu0 0.0
      %1057 = vmatpush1.msra.mxu0 0.0
      %1058 = vmatprep.subr.mxu0 0.0
      %1059 = vmatpush1.msra.mxu0 0.0
      %1060 = vmatprep.subr.mxu0 0.0
      %1061 = vmatpush1.msra.mxu0 0.0
      %1062 = vmatprep.subr.mxu0 0.0
      %1063 = vmatpush1.msra.mxu0 0.0
      %1064 = vmatprep.subr.mxu0 0.0
      %1065 = vmatpush1.msra.mxu0 0.0
      %1066 = vmatprep.subr.mxu0 0.0
      %1067 = vmatpush1.msra.mxu0 0.0
      %1068 = vmatprep.subr.mxu0 0.0
      %1069 = vmatpush1.msra.mxu0 0.0
      %1070 = vmatprep.subr.mxu0 0.0
      %1071 = vmatpush1.msra.mxu0 0.0
      %1072 = vmatprep.subr.mxu0 0.0
      %1073 = vmatpush1.msra.mxu0 0.0
      %1074 = vmatprep.subr.mxu0 0.0
      %1075 = vmatpush1.msra.mxu0 0.0
      %1076 = vmatprep.subr.mxu0 0.0
      %1077 = vmatpush1.msra.mxu0 0.0
      %1078 = vmatprep.subr.mxu0 0.0
      %1079 = vmatpush1.msra.mxu0 0.0
      %1080 = vmatprep.subr.mxu0 0.0
      %1081 = vmatpush1.msra.mxu0 0.0
      %1082 = vmatprep.subr.mxu0 0.0
      %1083 = vmatpush1.msra.mxu0 %v971
      %1084 = vmatprep.subr.mxu0 0.0
      %1085 = vmatpush2.msra.mxu0 0.0
      %1086 = vmatprep.subr.mxu0 0.0
      %1087 = vmatpush2.msra.mxu0 0.0
      %1088 = vmatprep.subr.mxu0 0.0
      %1089 = vmatpush2.msra.mxu0 0.0
      %1090 = vmatprep.subr.mxu0 0.0
      %1091 = vmatpush2.msra.mxu0 0.0
      %1092 = vmatprep.subr.mxu0 0.0
      %1093 = vmatpush2.msra.mxu0 0.0
      %1094 = vmatprep.subr.mxu0 0.0
      %1095 = vmatpush2.msra.mxu0 0.0
      %1096 = vmatprep.subr.mxu0 0.0
      %1097 = vmatpush2.msra.mxu0 0.0
      %1098 = vmatprep.subr.mxu0 0.0
      %1099 = vmatpush2.msra.mxu0 0.0
      %1100 = vmatprep.subr.mxu0 0.0
      %1101 = vmatpush2.msra.mxu0 0.0
      %1102 = vmatprep.subr.mxu0 0.0
      %1103 = vmatpush2.msra.mxu0 0.0
      %1104 = vmatprep.subr.mxu0 0.0
      %1105 = vmatpush2.msra.mxu0 0.0
      %1106 = vmatprep.subr.mxu0 0.0
      %1107 = vmatpush2.msra.mxu0 0.0
      %1108 = vmatprep.subr.mxu0 0.0
      %1109 = vmatpush2.msra.mxu0 0.0
      %1110 = vmatprep.subr.mxu0 0.0
      %1111 = vmatpush2.msra.mxu0 0.0
      %1112 = vmatprep.subr.mxu0 0.0
      %1113 = vmatpush2.msra.mxu0 0.0
      %1114 = vmatprep.subr.mxu0 0.0
      %1115 = vmatpush2.msra.mxu0 0.0
      %1116 = vmatprep.mubr.f32.mxu0 0.0
      %1117 = vmatmul.mubr.f32.gmra.mxu0 %v979
      %v1118 = vpop.f32.mrf.mxu0
      %v1119 = vadd.f32 0.0, %v1118
      %v1120 = vpop.f32.mrf.mxu0
      %1121 = vdwg.mxu0
      %v1122 = vadd.f32 %v961, %v1048
      %v1123 = vadd.f32 %v962, %v1050
      %v1124 = vadd.f32 %v963, %v1119
      %s1125 = scalar_lea.vmem %s1, 48
      %v1126 = vld [vmem:[%s1125] sm:$0xff]
      %1127 = vrot.lane.b32.xlu0 %v172, 92
      %v1128 = vpop.permute.xlu0 %1127
      %1129 = vrot.lane.b32.xlu0 %v173, 92
      %v1130 = vpop.permute.xlu0 %1129
      %1131 = vrot.lane.b32.xlu0 %v174, 92
      %v1132 = vpop.permute.xlu0 %1131
      %vm1133 = vcmask 752640
      %v1134 = vsel %vm1133, %v1128, %v1130
      %v1135 = vsel %vm1133, %v1130, %v1132
      %v1140 = vsel %vm192, %v1126, 0
      %1142 = vmatprep.subr.mxu0 0.0
      %1143 = vmatpush1.msra.mxu0 0.0
      %1144 = vmatprep.subr.mxu0 0.0
      %1145 = vmatpush1.msra.mxu0 0.0
      %1146 = vmatprep.subr.mxu0 0.0
      %1147 = vmatpush1.msra.mxu0 0.0
      %1148 = vmatprep.subr.mxu0 0.0
      %1149 = vmatpush1.msra.mxu0 0.0
      %1150 = vmatprep.subr.mxu0 0.0
      %1151 = vmatpush1.msra.mxu0 0.0
      %1152 = vmatprep.subr.mxu0 0.0
      %1153 = vmatpush1.msra.mxu0 0.0
      %1154 = vmatprep.subr.mxu0 0.0
      %1155 = vmatpush1.msra.mxu0 0.0
      %1156 = vmatprep.subr.mxu0 0.0
      %1157 = vmatpush1.msra.mxu0 0.0
      %1158 = vmatprep.subr.mxu0 0.0
      %1159 = vmatpush1.msra.mxu0 0.0
      %1160 = vmatprep.subr.mxu0 0.0
      %1161 = vmatpush1.msra.mxu0 0.0
      %1162 = vmatprep.subr.mxu0 0.0
      %1163 = vmatpush1.msra.mxu0 0.0
      %1164 = vmatprep.subr.mxu0 0.0
      %1165 = vmatpush1.msra.mxu0 0.0
      %1166 = vmatprep.subr.mxu0 0.0
      %1167 = vmatpush1.msra.mxu0 0.0
      %1168 = vmatprep.subr.mxu0 0.0
      %1169 = vmatpush1.msra.mxu0 0.0
      %1170 = vmatprep.subr.mxu0 0.0
      %1171 = vmatpush1.msra.mxu0 0.0
      %1172 = vmatprep.subr.mxu0 %v1135
      %1173 = vmatpush1.msra.mxu0 %v1134
      %1174 = vmatprep.subr.mxu0 0.0
      %1175 = vmatpush2.msra.mxu0 0.0
      %1176 = vmatprep.subr.mxu0 0.0
      %1177 = vmatpush2.msra.mxu0 0.0
      %1178 = vmatprep.subr.mxu0 0.0
      %1179 = vmatpush2.msra.mxu0 0.0
      %1180 = vmatprep.subr.mxu0 0.0
      %1181 = vmatpush2.msra.mxu0 0.0
      %1182 = vmatprep.subr.mxu0 0.0
      %1183 = vmatpush2.msra.mxu0 0.0
      %1184 = vmatprep.subr.mxu0 0.0
      %1185 = vmatpush2.msra.mxu0 0.0
      %1186 = vmatprep.subr.mxu0 0.0
      %1187 = vmatpush2.msra.mxu0 0.0
      %1188 = vmatprep.subr.mxu0 0.0
      %1189 = vmatpush2.msra.mxu0 0.0
      %1190 = vmatprep.subr.mxu0 0.0
      %1191 = vmatpush2.msra.mxu0 0.0
      %1192 = vmatprep.subr.mxu0 0.0
      %1193 = vmatpush2.msra.mxu0 0.0
      %1194 = vmatprep.subr.mxu0 0.0
      %1195 = vmatpush2.msra.mxu0 0.0
      %1196 = vmatprep.subr.mxu0 0.0
      %1197 = vmatpush2.msra.mxu0 0.0
      %1198 = vmatprep.subr.mxu0 0.0
      %1199 = vmatpush2.msra.mxu0 0.0
      %1200 = vmatprep.subr.mxu0 0.0
      %1201 = vmatpush2.msra.mxu0 0.0
      %1202 = vmatprep.subr.mxu0 0.0
      %1203 = vmatpush2.msra.mxu0 0.0
      %1204 = vmatprep.subr.mxu0 0.0
      %1205 = vmatpush2.msra.mxu0 0.0
      %1206 = vmatprep.mubr.f32.mxu0 0.0
      %1207 = vmatmul.mubr.f32.gmra.mxu0 %v1140
      %v1208 = vpop.f32.mrf.mxu0
      %v1209 = vadd.f32 0.0, %v1208
      %v1210 = vpop.f32.mrf.mxu0
      %v1211 = vadd.f32 0.0, %v1210
      %1212 = vdwg.mxu0
      %1213 = vmatprep.subr.mxu0 0.0
      %1214 = vmatpush1.msra.mxu0 0.0
      %1215 = vmatprep.subr.mxu0 0.0
      %1216 = vmatpush1.msra.mxu0 0.0
      %1217 = vmatprep.subr.mxu0 0.0
      %1218 = vmatpush1.msra.mxu0 0.0
      %1219 = vmatprep.subr.mxu0 0.0
      %1220 = vmatpush1.msra.mxu0 0.0
      %1221 = vmatprep.subr.mxu0 0.0
      %1222 = vmatpush1.msra.mxu0 0.0
      %1223 = vmatprep.subr.mxu0 0.0
      %1224 = vmatpush1.msra.mxu0 0.0
      %1225 = vmatprep.subr.mxu0 0.0
      %1226 = vmatpush1.msra.mxu0 0.0
      %1227 = vmatprep.subr.mxu0 0.0
      %1228 = vmatpush1.msra.mxu0 0.0
      %1229 = vmatprep.subr.mxu0 0.0
      %1230 = vmatpush1.msra.mxu0 0.0
      %1231 = vmatprep.subr.mxu0 0.0
      %1232 = vmatpush1.msra.mxu0 0.0
      %1233 = vmatprep.subr.mxu0 0.0
      %1234 = vmatpush1.msra.mxu0 0.0
      %1235 = vmatprep.subr.mxu0 0.0
      %1236 = vmatpush1.msra.mxu0 0.0
      %1237 = vmatprep.subr.mxu0 0.0
      %1238 = vmatpush1.msra.mxu0 0.0
      %1239 = vmatprep.subr.mxu0 0.0
      %1240 = vmatpush1.msra.mxu0 0.0
      %1241 = vmatprep.subr.mxu0 0.0
      %1242 = vmatpush1.msra.mxu0 0.0
      %1243 = vmatprep.subr.mxu0 0.0
      %1244 = vmatpush1.msra.mxu0 %v1132
      %1245 = vmatprep.subr.mxu0 0.0
      %1246 = vmatpush2.msra.mxu0 0.0
      %1247 = vmatprep.subr.mxu0 0.0
      %1248 = vmatpush2.msra.mxu0 0.0
      %1249 = vmatprep.subr.mxu0 0.0
      %1250 = vmatpush2.msra.mxu0 0.0
      %1251 = vmatprep.subr.mxu0 0.0
      %1252 = vmatpush2.msra.mxu0 0.0
      %1253 = vmatprep.subr.mxu0 0.0
      %1254 = vmatpush2.msra.mxu0 0.0
      %1255 = vmatprep.subr.mxu0 0.0
      %1256 = vmatpush2.msra.mxu0 0.0
      %1257 = vmatprep.subr.mxu0 0.0
      %1258 = vmatpush2.msra.mxu0 0.0
      %1259 = vmatprep.subr.mxu0 0.0
      %1260 = vmatpush2.msra.mxu0 0.0
      %1261 = vmatprep.subr.mxu0 0.0
      %1262 = vmatpush2.msra.mxu0 0.0
      %1263 = vmatprep.subr.mxu0 0.0
      %1264 = vmatpush2.msra.mxu0 0.0
      %1265 = vmatprep.subr.mxu0 0.0
      %1266 = vmatpush2.msra.mxu0 0.0
      %1267 = vmatprep.subr.mxu0 0.0
      %1268 = vmatpush2.msra.mxu0 0.0
      %1269 = vmatprep.subr.mxu0 0.0
      %1270 = vmatpush2.msra.mxu0 0.0
      %1271 = vmatprep.subr.mxu0 0.0
      %1272 = vmatpush2.msra.mxu0 0.0
      %1273 = vmatprep.subr.mxu0 0.0
      %1274 = vmatpush2.msra.mxu0 0.0
      %1275 = vmatprep.subr.mxu0 0.0
      %1276 = vmatpush2.msra.mxu0 0.0
      %1277 = vmatprep.mubr.f32.mxu0 0.0
      %1278 = vmatmul.mubr.f32.gmra.mxu0 %v1140
      %v1279 = vpop.f32.mrf.mxu0
      %v1280 = vadd.f32 0.0, %v1279
      %v1281 = vpop.f32.mrf.mxu0
      %1282 = vdwg.mxu0
      %v1283 = vadd.f32 %v1122, %v1209
      %v1284 = vadd.f32 %v1123, %v1211
      %v1285 = vadd.f32 %v1124, %v1280
      %s1286 = scalar_lea.vmem %s1, 56
      %v1287 = vld [vmem:[%s1286] sm:$0xff]
      %1288 = vrot.lane.b32.xlu0 %v172, 91
      %v1289 = vpop.permute.xlu0 %1288
      %1290 = vrot.lane.b32.xlu0 %v173, 91
      %v1291 = vpop.permute.xlu0 %1290
      %1292 = vrot.lane.b32.xlu0 %v174, 91
      %v1293 = vpop.permute.xlu0 %1292
      %vm1294 = vcmask 744448
      %v1295 = vsel %vm1294, %v1289, %v1291
      %v1296 = vsel %vm1294, %v1291, %v1293
      %v1301 = vsel %vm192, %v1287, 0
      %1303 = vmatprep.subr.mxu0 0.0
      %1304 = vmatpush1.msra.mxu0 0.0
      %1305 = vmatprep.subr.mxu0 0.0
      %1306 = vmatpush1.msra.mxu0 0.0
      %1307 = vmatprep.subr.mxu0 0.0
      %1308 = vmatpush1.msra.mxu0 0.0
      %1309 = vmatprep.subr.mxu0 0.0
      %1310 = vmatpush1.msra.mxu0 0.0
      %1311 = vmatprep.subr.mxu0 0.0
      %1312 = vmatpush1.msra.mxu0 0.0
      %1313 = vmatprep.subr.mxu0 0.0
      %1314 = vmatpush1.msra.mxu0 0.0
      %1315 = vmatprep.subr.mxu0 0.0
      %1316 = vmatpush1.msra.mxu0 0.0
      %1317 = vmatprep.subr.mxu0 0.0
      %1318 = vmatpush1.msra.mxu0 0.0
      %1319 = vmatprep.subr.mxu0 0.0
      %1320 = vmatpush1.msra.mxu0 0.0
      %1321 = vmatprep.subr.mxu0 0.0
      %1322 = vmatpush1.msra.mxu0 0.0
      %1323 = vmatprep.subr.mxu0 0.0
      %1324 = vmatpush1.msra.mxu0 0.0
      %1325 = vmatprep.subr.mxu0 0.0
      %1326 = vmatpush1.msra.mxu0 0.0
      %1327 = vmatprep.subr.mxu0 0.0
      %1328 = vmatpush1.msra.mxu0 0.0
      %1329 = vmatprep.subr.mxu0 0.0
      %1330 = vmatpush1.msra.mxu0 0.0
      %1331 = vmatprep.subr.mxu0 0.0
      %1332 = vmatpush1.msra.mxu0 0.0
      %1333 = vmatprep.subr.mxu0 %v1296
      %1334 = vmatpush1.msra.mxu0 %v1295
      %1335 = vmatprep.subr.mxu0 0.0
      %1336 = vmatpush2.msra.mxu0 0.0
      %1337 = vmatprep.subr.mxu0 0.0
      %1338 = vmatpush2.msra.mxu0 0.0
      %1339 = vmatprep.subr.mxu0 0.0
      %1340 = vmatpush2.msra.mxu0 0.0
      %1341 = vmatprep.subr.mxu0 0.0
      %1342 = vmatpush2.msra.mxu0 0.0
      %1343 = vmatprep.subr.mxu0 0.0
      %1344 = vmatpush2.msra.mxu0 0.0
      %1345 = vmatprep.subr.mxu0 0.0
      %1346 = vmatpush2.msra.mxu0 0.0
      %1347 = vmatprep.subr.mxu0 0.0
      %1348 = vmatpush2.msra.mxu0 0.0
      %1349 = vmatprep.subr.mxu0 0.0
      %1350 = vmatpush2.msra.mxu0 0.0
      %1351 = vmatprep.subr.mxu0 0.0
      %1352 = vmatpush2.msra.mxu0 0.0
      %1353 = vmatprep.subr.mxu0 0.0
      %1354 = vmatpush2.msra.mxu0 0.0
      %1355 = vmatprep.subr.mxu0 0.0
      %1356 = vmatpush2.msra.mxu0 0.0
      %1357 = vmatprep.subr.mxu0 0.0
      %1358 = vmatpush2.msra.mxu0 0.0
      %1359 = vmatprep.subr.mxu0 0.0
      %1360 = vmatpush2.msra.mxu0 0.0
      %1361 = vmatprep.subr.mxu0 0.0
      %1362 = vmatpush2.msra.mxu0 0.0
      %1363 = vmatprep.subr.mxu0 0.0
      %1364 = vmatpush2.msra.mxu0 0.0
      %1365 = vmatprep.subr.mxu0 0.0
      %1366 = vmatpush2.msra.mxu0 0.0
      %1367 = vmatprep.mubr.f32.mxu0 0.0
      %1368 = vmatmul.mubr.f32.gmra.mxu0 %v1301
      %v1369 = vpop.f32.mrf.mxu0
      %v1370 = vadd.f32 0.0, %v1369
      %v1371 = vpop.f32.mrf.mxu0
      %v1372 = vadd.f32 0.0, %v1371
      %1373 = vdwg.mxu0
      %1374 = vmatprep.subr.mxu0 0.0
      %1375 = vmatpush1.msra.mxu0 0.0
      %1376 = vmatprep.subr.mxu0 0.0
      %1377 = vmatpush1.msra.mxu0 0.0
      %1378 = vmatprep.subr.mxu0 0.0
      %1379 = vmatpush1.msra.mxu0 0.0
      %1380 = vmatprep.subr.mxu0 0.0
      %1381 = vmatpush1.msra.mxu0 0.0
      %1382 = vmatprep.subr.mxu0 0.0
      %1383 = vmatpush1.msra.mxu0 0.0
      %1384 = vmatprep.subr.mxu0 0.0
      %1385 = vmatpush1.msra.mxu0 0.0
      %1386 = vmatprep.subr.mxu0 0.0
      %1387 = vmatpush1.msra.mxu0 0.0
      %1388 = vmatprep.subr.mxu0 0.0
      %1389 = vmatpush1.msra.mxu0 0.0
      %1390 = vmatprep.subr.mxu0 0.0
      %1391 = vmatpush1.msra.mxu0 0.0
      %1392 = vmatprep.subr.mxu0 0.0
      %1393 = vmatpush1.msra.mxu0 0.0
      %1394 = vmatprep.subr.mxu0 0.0
      %1395 = vmatpush1.msra.mxu0 0.0
      %1396 = vmatprep.subr.mxu0 0.0
      %1397 = vmatpush1.msra.mxu0 0.0
      %1398 = vmatprep.subr.mxu0 0.0
      %1399 = vmatpush1.msra.mxu0 0.0
      %1400 = vmatprep.subr.mxu0 0.0
      %1401 = vmatpush1.msra.mxu0 0.0
      %1402 = vmatprep.subr.mxu0 0.0
      %1403 = vmatpush1.msra.mxu0 0.0
      %1404 = vmatprep.subr.mxu0 0.0
      %1405 = vmatpush1.msra.mxu0 %v1293
      %1406 = vmatprep.subr.mxu0 0.0
      %1407 = vmatpush2.msra.mxu0 0.0
      %1408 = vmatprep.subr.mxu0 0.0
      %1409 = vmatpush2.msra.mxu0 0.0
      %1410 = vmatprep.subr.mxu0 0.0
      %1411 = vmatpush2.msra.mxu0 0.0
      %1412 = vmatprep.subr.mxu0 0.0
      %1413 = vmatpush2.msra.mxu0 0.0
      %1414 = vmatprep.subr.mxu0 0.0
      %1415 = vmatpush2.msra.mxu0 0.0
      %1416 = vmatprep.subr.mxu0 0.0
      %1417 = vmatpush2.msra.mxu0 0.0
      %1418 = vmatprep.subr.mxu0 0.0
      %1419 = vmatpush2.msra.mxu0 0.0
      %1420 = vmatprep.subr.mxu0 0.0
      %1421 = vmatpush2.msra.mxu0 0.0
      %1422 = vmatprep.subr.mxu0 0.0
      %1423 = vmatpush2.msra.mxu0 0.0
      %1424 = vmatprep.subr.mxu0 0.0
      %1425 = vmatpush2.msra.mxu0 0.0
      %1426 = vmatprep.subr.mxu0 0.0
      %1427 = vmatpush2.msra.mxu0 0.0
      %1428 = vmatprep.subr.mxu0 0.0
      %1429 = vmatpush2.msra.mxu0 0.0
      %1430 = vmatprep.subr.mxu0 0.0
      %1431 = vmatpush2.msra.mxu0 0.0
      %1432 = vmatprep.subr.mxu0 0.0
      %1433 = vmatpush2.msra.mxu0 0.0
      %1434 = vmatprep.subr.mxu0 0.0
      %1435 = vmatpush2.msra.mxu0 0.0
      %1436 = vmatprep.subr.mxu0 0.0
      %1437 = vmatpush2.msra.mxu0 0.0
      %1438 = vmatprep.mubr.f32.mxu0 0.0
      %1439 = vmatmul.mubr.f32.gmra.mxu0 %v1301
      %v1440 = vpop.f32.mrf.mxu0
      %v1441 = vadd.f32 0.0, %v1440
      %v1442 = vpop.f32.mrf.mxu0
      %1443 = vdwg.mxu0
      %v1444 = vadd.f32 %v1283, %v1370
      %v1445 = vadd.f32 %v1284, %v1372
      %v1446 = vadd.f32 %v1285, %v1441
      %s1447 = scalar_lea.vmem %s1, 64
      %v1448 = vld [vmem:[%s1447] sm:$0xff]
      %1449 = vrot.lane.b32.xlu0 %v172, 90
      %v1450 = vpop.permute.xlu0 %1449
      %1451 = vrot.lane.b32.xlu0 %v173, 90
      %v1452 = vpop.permute.xlu0 %1451
      %1453 = vrot.lane.b32.xlu0 %v174, 90
      %v1454 = vpop.permute.xlu0 %1453
      %vm1455 = vcmask 736256
      %v1456 = vsel %vm1455, %v1450, %v1452
      %v1457 = vsel %vm1455, %v1452, %v1454
      %v1462 = vsel %vm192, %v1448, 0
      %1464 = vmatprep.subr.mxu0 0.0
      %1465 = vmatpush1.msra.mxu0 0.0
      %1466 = vmatprep.subr.mxu0 0.0
      %1467 = vmatpush1.msra.mxu0 0.0
      %1468 = vmatprep.subr.mxu0 0.0
      %1469 = vmatpush1.msra.mxu0 0.0
      %1470 = vmatprep.subr.mxu0 0.0
      %1471 = vmatpush1.msra.mxu0 0.0
      %1472 = vmatprep.subr.mxu0 0.0
      %1473 = vmatpush1.msra.mxu0 0.0
      %1474 = vmatprep.subr.mxu0 0.0
      %1475 = vmatpush1.msra.mxu0 0.0
      %1476 = vmatprep.subr.mxu0 0.0
      %1477 = vmatpush1.msra.mxu0 0.0
      %1478 = vmatprep.subr.mxu0 0.0
      %1479 = vmatpush1.msra.mxu0 0.0
      %1480 = vmatprep.subr.mxu0 0.0
      %1481 = vmatpush1.msra.mxu0 0.0
      %1482 = vmatprep.subr.mxu0 0.0
      %1483 = vmatpush1.msra.mxu0 0.0
      %1484 = vmatprep.subr.mxu0 0.0
      %1485 = vmatpush1.msra.mxu0 0.0
      %1486 = vmatprep.subr.mxu0 0.0
      %1487 = vmatpush1.msra.mxu0 0.0
      %1488 = vmatprep.subr.mxu0 0.0
      %1489 = vmatpush1.msra.mxu0 0.0
      %1490 = vmatprep.subr.mxu0 0.0
      %1491 = vmatpush1.msra.mxu0 0.0
      %1492 = vmatprep.subr.mxu0 0.0
      %1493 = vmatpush1.msra.mxu0 0.0
      %1494 = vmatprep.subr.mxu0 %v1457
      %1495 = vmatpush1.msra.mxu0 %v1456
      %1496 = vmatprep.subr.mxu0 0.0
      %1497 = vmatpush2.msra.mxu0 0.0
      %1498 = vmatprep.subr.mxu0 0.0
      %1499 = vmatpush2.msra.mxu0 0.0
      %1500 = vmatprep.subr.mxu0 0.0
      %1501 = vmatpush2.msra.mxu0 0.0
      %1502 = vmatprep.subr.mxu0 0.0
      %1503 = vmatpush2.msra.mxu0 0.0
      %1504 = vmatprep.subr.mxu0 0.0
      %1505 = vmatpush2.msra.mxu0 0.0
      %1506 = vmatprep.subr.mxu0 0.0
      %1507 = vmatpush2.msra.mxu0 0.0
      %1508 = vmatprep.subr.mxu0 0.0
      %1509 = vmatpush2.msra.mxu0 0.0
      %1510 = vmatprep.subr.mxu0 0.0
      %1511 = vmatpush2.msra.mxu0 0.0
      %1512 = vmatprep.subr.mxu0 0.0
      %1513 = vmatpush2.msra.mxu0 0.0
      %1514 = vmatprep.subr.mxu0 0.0
      %1515 = vmatpush2.msra.mxu0 0.0
      %1516 = vmatprep.subr.mxu0 0.0
      %1517 = vmatpush2.msra.mxu0 0.0
      %1518 = vmatprep.subr.mxu0 0.0
      %1519 = vmatpush2.msra.mxu0 0.0
      %1520 = vmatprep.subr.mxu0 0.0
      %1521 = vmatpush2.msra.mxu0 0.0
      %1522 = vmatprep.subr.mxu0 0.0
      %1523 = vmatpush2.msra.mxu0 0.0
      %1524 = vmatprep.subr.mxu0 0.0
      %1525 = vmatpush2.msra.mxu0 0.0
      %1526 = vmatprep.subr.mxu0 0.0
      %1527 = vmatpush2.msra.mxu0 0.0
      %1528 = vmatprep.mubr.f32.mxu0 0.0
      %1529 = vmatmul.mubr.f32.gmra.mxu0 %v1462
      %v1530 = vpop.f32.mrf.mxu0
      %v1531 = vadd.f32 0.0, %v1530
      %v1532 = vpop.f32.mrf.mxu0
      %v1533 = vadd.f32 0.0, %v1532
      %1534 = vdwg.mxu0
      %1535 = vmatprep.subr.mxu0 0.0
      %1536 = vmatpush1.msra.mxu0 0.0
      %1537 = vmatprep.subr.mxu0 0.0
      %1538 = vmatpush1.msra.mxu0 0.0
      %1539 = vmatprep.subr.mxu0 0.0
      %1540 = vmatpush1.msra.mxu0 0.0
      %1541 = vmatprep.subr.mxu0 0.0
      %1542 = vmatpush1.msra.mxu0 0.0
      %1543 = vmatprep.subr.mxu0 0.0
      %1544 = vmatpush1.msra.mxu0 0.0
      %1545 = vmatprep.subr.mxu0 0.0
      %1546 = vmatpush1.msra.mxu0 0.0
      %1547 = vmatprep.subr.mxu0 0.0
      %1548 = vmatpush1.msra.mxu0 0.0
      %1549 = vmatprep.subr.mxu0 0.0
      %1550 = vmatpush1.msra.mxu0 0.0
      %1551 = vmatprep.subr.mxu0 0.0
      %1552 = vmatpush1.msra.mxu0 0.0
      %1553 = vmatprep.subr.mxu0 0.0
      %1554 = vmatpush1.msra.mxu0 0.0
      %1555 = vmatprep.subr.mxu0 0.0
      %1556 = vmatpush1.msra.mxu0 0.0
      %1557 = vmatprep.subr.mxu0 0.0
      %1558 = vmatpush1.msra.mxu0 0.0
      %1559 = vmatprep.subr.mxu0 0.0
      %1560 = vmatpush1.msra.mxu0 0.0
      %1561 = vmatprep.subr.mxu0 0.0
      %1562 = vmatpush1.msra.mxu0 0.0
      %1563 = vmatprep.subr.mxu0 0.0
      %1564 = vmatpush1.msra.mxu0 0.0
      %1565 = vmatprep.subr.mxu0 0.0
      %1566 = vmatpush1.msra.mxu0 %v1454
      %1567 = vmatprep.subr.mxu0 0.0
      %1568 = vmatpush2.msra.mxu0 0.0
      %1569 = vmatprep.subr.mxu0 0.0
      %1570 = vmatpush2.msra.mxu0 0.0
      %1571 = vmatprep.subr.mxu0 0.0
      %1572 = vmatpush2.msra.mxu0 0.0
      %1573 = vmatprep.subr.mxu0 0.0
      %1574 = vmatpush2.msra.mxu0 0.0
      %1575 = vmatprep.subr.mxu0 0.0
      %1576 = vmatpush2.msra.mxu0 0.0
      %1577 = vmatprep.subr.mxu0 0.0
      %1578 = vmatpush2.msra.mxu0 0.0
      %1579 = vmatprep.subr.mxu0 0.0
      %1580 = vmatpush2.msra.mxu0 0.0
      %1581 = vmatprep.subr.mxu0 0.0
      %1582 = vmatpush2.msra.mxu0 0.0
      %1583 = vmatprep.subr.mxu0 0.0
      %1584 = vmatpush2.msra.mxu0 0.0
      %1585 = vmatprep.subr.mxu0 0.0
      %1586 = vmatpush2.msra.mxu0 0.0
      %1587 = vmatprep.subr.mxu0 0.0
      %1588 = vmatpush2.msra.mxu0 0.0
      %1589 = vmatprep.subr.mxu0 0.0
      %1590 = vmatpush2.msra.mxu0 0.0
      %1591 = vmatprep.subr.mxu0 0.0
      %1592 = vmatpush2.msra.mxu0 0.0
      %1593 = vmatprep.subr.mxu0 0.0
      %1594 = vmatpush2.msra.mxu0 0.0
      %1595 = vmatprep.subr.mxu0 0.0
      %1596 = vmatpush2.msra.mxu0 0.0
      %1597 = vmatprep.subr.mxu0 0.0
      %1598 = vmatpush2.msra.mxu0 0.0
      %1599 = vmatprep.mubr.f32.mxu0 0.0
      %1600 = vmatmul.mubr.f32.gmra.mxu0 %v1462
      %v1601 = vpop.f32.mrf.mxu0
      %v1602 = vadd.f32 0.0, %v1601
      %v1603 = vpop.f32.mrf.mxu0
      %1604 = vdwg.mxu0
      %v1605 = vadd.f32 %v1444, %v1531
      %v1606 = vadd.f32 %v1445, %v1533
      %v1607 = vadd.f32 %v1446, %v1602
      %v1608 = vld [vmem:[%s2] sm:$0xff]
      %1610 = vset.pattern.permute.xlu0 0
      %1611 = vperm.xlu0 %1610, %v1608
      %v1612 = vpop.permute.xlu0 %1611
      %v1614 = vadd.f32 %v1605, %v1612
      %v1615 = vadd.f32 %v1606, %v1612
      %v1616 = vadd.f32 %v1607, %v1612
      %1617 = vst [vmem:[%s170] sm:$0xff] %v1614
      %1618 = vst [vmem:[%s170 + $0x8] sm:$0xff] %v1615
      %vm1619 = vcmask 261120
      %1620 = vst.msk [vmem:[%s170 + $0x10] sm:$0xff] %vm1619, %v1616
      %p1621 = scmp.lt.s32.totalorder %s14, 1
      %s1622 = scalar_select %p1621, %s14, 1
      %s1623 = smul.addr %s1622, 3
      %s1624 = smul.addr %s1623, 8
      %s1625 = scalar_lea.vmem %s3, %s1624
      // Predicated region
      $region33: #{_lambda_.1} parent=31 // pred_check
        %p1626 = pneg %p100
      $region34: #{_lambda_.1} parent=31 // pred_check_branch
        %1628 = sbr.rel (%p1626) target = $region36
      $region35: #{_lambda_.1} parent=31 // pred_region
        _
      $region36: #{_lambda_.1} parent=31 // pred_fallthru
        _
    $region32: #{_lambda_.1} parent=5 // pred_fallthru
      _
    %p1629 = scmp.le.s32.totalorder 2, %s9
    // Predicated region
    $region37: #{_lambda_.1} parent=5 // pred_check
      %p1630 = pneg %p1629
    $region38: #{_lambda_.1} parent=5 // pred_check_branch
      %1632 = sbr.rel (%p1630) target = $region40
    $region39: #{_lambda_.1} parent=5 // pred_region
      %s1633 = ssub.s32 %s9, 2
      // Predicated region
      $region41: #{_lambda_.1} parent=39 // pred_check
        %p1634 = pneg %p106
      $region42: #{_lambda_.1} parent=39 // pred_check_branch
        %1636 = sbr.rel (%p1634) target = $region44
      $region43: #{_lambda_.1} parent=39 // pred_region
        %p1637 = scmp.lt.s32.totalorder %s15, 1
        %s1638 = scalar_select %p1637, %s15, 1
        %s1639 = smul.addr %s1638, 3
        %s1640 = smul.addr %s1639, 8
        %s1641 = scalar_lea.vmem %s3, %s1640
      $region44: #{_lambda_.1} parent=39 // pred_fallthru
        _
    $region40: #{_lambda_.1} parent=5 // pred_fallthru
      _
  $region6: #{_lambda_.1} parent=0 // loop_footer
    %s13 = sadd.s32 1, %s9
  $region7: #{_lambda_.1} parent=0 // loop_footer_branch
    %8 = sbr.rel target = $region3
  $region8: #{_lambda_.1} parent=0 // loop_exit
    _

</llo_original>
